<compile_context>
chip_gen: v7x
topology: tpu7x:2x2x1
jax: 0.10.0
libtpu: 0.0.40
codegen_flags: <defaults>
</compile_context>

<pallas_src>
import functools

import jax
import jax.numpy as jnp
from jax.experimental import pallas as pl
from jax.experimental.pallas import tpu as pltpu


def _edge_gat_kernel(h_ref, edge_ref, bias_ref, wn_ref, weae_ref, almat_ref,
                     armat_ref, dsthot_ref, heye_ref, hmask_ref, out_ref,
                     *, num_heads, head_dim):
    """One full edge-featured GATConv on a small dense graph, all in VMEM."""
    N = h_ref.shape[0]
    H = num_heads
    D = head_dim
    HD = H * D

    # --- projections & attention-score terms: all MXU matmuls ----------------
    feat = jnp.dot(h_ref[...], wn_ref[...], preferred_element_type=jnp.float32)      # (N, HD)
    el = jnp.dot(feat, almat_ref[...], preferred_element_type=jnp.float32)           # (N, H)   a_l . feat[s]
    er = jnp.dot(feat, armat_ref[...], preferred_element_type=jnp.float32)           # (N, H)   a_r . feat[d]
    ee = jnp.dot(edge_ref[...], weae_ref[...], preferred_element_type=jnp.float32)   # (N*N, H) a_e . (W_e eft)
    erf = jnp.dot(dsthot_ref[...], er, preferred_element_type=jnp.float32)           # (N*N, H) er[d] at row d*N+s

    # --- scores: (N_dst, N_src, H), heads on the lane axis --------------------
    raw = (ee + erf).reshape(N, N, H) + el[None, :, :]
    raw = jnp.where(raw >= 0.0, raw, 0.2 * raw)            # leaky_relu(0.2)
    masked = raw + bias_ref[...]                           # additive -1e30 mask on non-edges

    heye = heye_ref[...]                                   # (H, H) identity
    hmask = hmask_ref[...]                                 # (H, HD) per-head block mask

    # --- per-head masked softmax + aggregation (small 2D ops, single store) ---
    rst = jnp.zeros((N, HD), dtype=jnp.float32)
    for head in range(H):                                  # H is tiny and static
        sel = heye[head].reshape(1, 1, H)
        e_h = jnp.sum(masked * sel, axis=-1)               # (N, N) head slice via lane reduce
        m = jnp.max(e_h, axis=1, keepdims=True)
        p = jnp.exp(e_h - m)                               # masked entries underflow to 0
        denom = jnp.maximum(jnp.sum(p, axis=1, keepdims=True), 1e-9)
        alpha = p * pl.reciprocal(denom, approx=True)      # (N, N)
        f_h = feat * hmask[head].reshape(1, HD)            # zero outside this head's block
        rst = rst + jnp.dot(alpha, f_h, preferred_element_type=jnp.float32)

    rst = jnp.where(rst > 0.0, rst, jnp.exp(rst) - 1.0)    # elu
    out_ref[...] = rst                                     # single lane-dense store


def gat_conv(node_feat, edge_dense, adj, wn, we, al, ar, ae, *, num_heads):
    """Wrapper: fold weights, flatten edge tensor, one pallas_call (small graphs)."""
    N = node_feat.shape[0]
    HD = wn.shape[1]
    H = num_heads
    D = HD // H
    Fe = edge_dense.shape[-1]

    node_feat = node_feat.astype(jnp.float32)
    edge_flat = edge_dense.astype(jnp.float32).reshape(N * N, Fe)      # flatten in wrapper

    # fold a_e into the edge projection:  we_ae[:, h] = we[:, h*D:(h+1)*D] @ ae[h]
    we_ae = jnp.einsum("fhd,hd->fh", we.reshape(Fe, H, D), ae).astype(jnp.float32)
    # block matrices so feat @ al_mat -> el (N,H), feat @ ar_mat -> er (N,H)
    eye_h = jnp.eye(H, dtype=jnp.float32)
    al_mat = (al[:, :, None] * eye_h[:, None, :]).reshape(HD, H)
    ar_mat = (ar[:, :, None] * eye_h[:, None, :]).reshape(HD, H)
    # one-hot so MXU broadcasts er[d] onto flattened rows d*N+s.
    # TODO(synk): (N*N, N) one-hot is fine for small graphs only; a tiled /
    # broadcast formulation is needed if N grows (also tile dst rows for VMEM).
    dst_onehot = jax.nn.one_hot(jnp.repeat(jnp.arange(N), N), N, dtype=jnp.float32)
    # additive attention mask (0 on edges, -1e30 elsewhere), heads pre-broadcast
    bias3 = jnp.broadcast_to(
        jnp.where(adj > 0, 0.0, -1e30).astype(jnp.float32)[:, :, None], (N, N, H))
    head_mask = jnp.repeat(eye_h, D, axis=1)                           # (H, HD)

    def full_spec(shape):
        nd = len(shape)
        return pl.BlockSpec(shape, lambda i, nd=nd: (0,) * nd)

    kernel = functools.partial(_edge_gat_kernel, num_heads=H, head_dim=D)
    inputs = (node_feat, edge_flat, bias3, wn.astype(jnp.float32), we_ae,
              al_mat, ar_mat, dst_onehot, eye_h, head_mask)
    return pl.pallas_call(
        kernel,
        out_shape=jax.ShapeDtypeStruct((N, HD), jnp.float32),
        grid=(1,),
        in_specs=[full_spec(x.shape) for x in inputs],
        out_specs=full_spec((N, HD)),
        compiler_params=pltpu.CompilerParams(dimension_semantics=("parallel",)),
    )(*inputs)


def glorot(key, shape):
    fan_in, fan_out = shape[-2], shape[-1]
    std = (2.0 / (fan_in + fan_out)) ** 0.5 * (2.0 ** 0.5)  # xavier_normal, gain=sqrt(2)
    return std * jax.random.normal(key, shape, jnp.float32)


def init_gatconv_params(key, node_in, edge_in, out_size, heads):
    ks = jax.random.split(key, 5)
    return dict(
        wn=glorot(ks[0], (node_in, heads * out_size)),
        we=glorot(ks[1], (edge_in, heads * out_size)),
        al=glorot(ks[2], (heads, out_size)),
        ar=glorot(ks[3], (heads, out_size)),
        ae=glorot(ks[4], (heads, out_size)),
    )


def output_layer_forward(adj_list, edge_dense_list, h, params_list, heads):
    """OutputLayer.forward: only graph index 0 contributes (mirrors `if i == 0`)."""
    node_semantic_embeddings = []
    for i in range(len(adj_list)):
        if i == 0:
            p = params_list[i]
            emb = gat_conv(h, edge_dense_list[i], adj_list[i],
                           p["wn"], p["we"], p["al"], p["ar"], p["ae"],
                           num_heads=heads)
            node_semantic_embeddings.append(emb)
    return node_semantic_embeddings[0]


if __name__ == "__main__":
    key = jax.random.PRNGKey(0)
    keys = jax.random.split(key, 8)

    # sizes implied by the module
    N = 8            # nodes
    in_size = 16     # node feature dim
    edge_in_ft = 8   # edge feature dim
    out_size = 16    # per-head output dim
    heads = 2
    num_sc = 2       # num_simplicial_complexes (only index 0 is used in forward)

    # graph 0: self-loops + directed ring (E = 2N edges), adj[dst, src] = 1
    src = jnp.concatenate([jnp.arange(N), jnp.arange(N)])
    dst = jnp.concatenate([jnp.arange(N), (jnp.arange(N) + 1) % N])
    E = int(src.shape[0])
    adj0 = jnp.zeros((N, N), jnp.float32).at[dst, src].set(1.0)
    edge_feat0 = jax.random.normal(keys[1], (E, edge_in_ft), jnp.float32)
    edge_dense0 = jnp.zeros((N, N, edge_in_ft), jnp.float32).at[dst, src].set(edge_feat0)

    # graph 1: present in the input list but ignored by OutputLayer (i != 0)
    src1 = jnp.concatenate([jnp.arange(N), (jnp.arange(N) + 2) % N])
    dst1 = jnp.concatenate([jnp.arange(N), jnp.arange(N)])
    adj1 = jnp.zeros((N, N), jnp.float32).at[dst1, src1].set(1.0)
    edge_feat1 = jax.random.normal(keys[2], (2 * N, edge_in_ft), jnp.float32)
    edge_dense1 = jnp.zeros((N, N, edge_in_ft), jnp.float32).at[dst1, src1].set(edge_feat1)

    h = jax.random.normal(keys[0], (N, in_size), jnp.float32)

    # one GATConv(edge_in_ft_size, in_size, out_size, heads, dropout, dropout, elu)
    # per simplicial complex (only params[0] is exercised by forward).
    params = [init_gatconv_params(keys[3 + i], node_in=in_size, edge_in=edge_in_ft,
                                  out_size=out_size, heads=heads)
              for i in range(num_sc)]

    # TODO(synk): feat_drop / attn_drop omitted (eval-mode identity).
    out = output_layer_forward([adj0, adj1], [edge_dense0, edge_dense1], h, params, heads)
    out = jax.block_until_ready(out)

    assert out.shape == (N, heads * out_size)
    assert bool(jnp.all(jnp.isfinite(out)))
    print("KERNEL_OK")
</pallas_src>

<mosaic_0001>
module attributes {stable_mosaic.version = 11 : i64} {
  func.func @_edge_gat_kernel(%arg0: i32, %arg1: memref<8x16xf32, #tpu.memory_space<vmem>>, %arg2: memref<64x8xf32, #tpu.memory_space<vmem>>, %arg3: memref<8x8x2xf32, #tpu.memory_space<vmem>>, %arg4: memref<16x32xf32, #tpu.memory_space<vmem>>, %arg5: memref<8x2xf32, #tpu.memory_space<vmem>>, %arg6: memref<32x2xf32, #tpu.memory_space<vmem>>, %arg7: memref<32x2xf32, #tpu.memory_space<vmem>>, %arg8: memref<64x8xf32, #tpu.memory_space<vmem>>, %arg9: memref<2x2xf32, #tpu.memory_space<vmem>>, %arg10: memref<2x32xf32, #tpu.memory_space<vmem>>, %arg11: memref<8x32xf32, #tpu.memory_space<vmem>>) attributes {dimension_semantics = [#tpu.dimension_semantics<parallel>], iteration_bounds = array<i64: 1>, scalar_prefetch = 0 : i64, scratch_operands = 0 : i64, tpu.core_type = #tpu.core_type<tc>, window_params = [{pipeline_mode = #tpu.pipeline_mode<synchronous>, transform_indices = @transform_0, window_bounds = array<i64: 8, 16>}, {pipeline_mode = #tpu.pipeline_mode<synchronous>, transform_indices = @transform_1, window_bounds = array<i64: 64, 8>}, {pipeline_mode = #tpu.pipeline_mode<synchronous>, transform_indices = @transform_2, window_bounds = array<i64: 8, 8, 2>}, {pipeline_mode = #tpu.pipeline_mode<synchronous>, transform_indices = @transform_3, window_bounds = array<i64: 16, 32>}, {pipeline_mode = #tpu.pipeline_mode<synchronous>, transform_indices = @transform_4, window_bounds = array<i64: 8, 2>}, {pipeline_mode = #tpu.pipeline_mode<synchronous>, transform_indices = @transform_5, window_bounds = array<i64: 32, 2>}, {pipeline_mode = #tpu.pipeline_mode<synchronous>, transform_indices = @transform_6, window_bounds = array<i64: 32, 2>}, {pipeline_mode = #tpu.pipeline_mode<synchronous>, transform_indices = @transform_7, window_bounds = array<i64: 64, 8>}, {pipeline_mode = #tpu.pipeline_mode<synchronous>, transform_indices = @transform_8, window_bounds = array<i64: 2, 2>}, {pipeline_mode = #tpu.pipeline_mode<synchronous>, transform_indices = @transform_9, window_bounds = array<i64: 2, 32>}, {pipeline_mode = #tpu.pipeline_mode<synchronous>, transform_indices = @transform_10, window_bounds = array<i64: 8, 32>}]} {
    %c0 = arith.constant 0 : index
    %c0_0 = arith.constant 0 : index
    %0 = vector.load %arg1[%c0, %c0_0] : memref<8x16xf32, #tpu.memory_space<vmem>>, vector<8x16xf32>
    %c0_1 = arith.constant 0 : index
    %c0_2 = arith.constant 0 : index
    %1 = vector.load %arg4[%c0_1, %c0_2] : memref<16x32xf32, #tpu.memory_space<vmem>>, vector<16x32xf32>
    %cst = arith.constant dense<0.000000e+00> : vector<8x32xf32>
    %2 = tpu.matmul %0, %1, %cst {dimension_numbers = #tpu.dot_dimension_numbers<[1], [0], [0], [1], [0, 0, 1, 1], [], []>} : vector<8x16xf32>, vector<16x32xf32>, vector<8x32xf32> -> vector<8x32xf32>
    %c0_3 = arith.constant 0 : index
    %c0_4 = arith.constant 0 : index
    %3 = vector.load %arg6[%c0_3, %c0_4] : memref<32x2xf32, #tpu.memory_space<vmem>>, vector<32x2xf32>
    %cst_5 = arith.constant dense<0.000000e+00> : vector<8x2xf32>
    %4 = tpu.matmul %2, %3, %cst_5 {dimension_numbers = #tpu.dot_dimension_numbers<[1], [0], [0], [1], [0, 0, 1, 1], [], []>} : vector<8x32xf32>, vector<32x2xf32>, vector<8x2xf32> -> vector<8x2xf32>
    %c0_6 = arith.constant 0 : index
    %c0_7 = arith.constant 0 : index
    %5 = vector.load %arg7[%c0_6, %c0_7] : memref<32x2xf32, #tpu.memory_space<vmem>>, vector<32x2xf32>
    %cst_8 = arith.constant dense<0.000000e+00> : vector<8x2xf32>
    %6 = tpu.matmul %2, %5, %cst_8 {dimension_numbers = #tpu.dot_dimension_numbers<[1], [0], [0], [1], [0, 0, 1, 1], [], []>} : vector<8x32xf32>, vector<32x2xf32>, vector<8x2xf32> -> vector<8x2xf32>
    %c0_9 = arith.constant 0 : index
    %c0_10 = arith.constant 0 : index
    %7 = vector.load %arg2[%c0_9, %c0_10] : memref<64x8xf32, #tpu.memory_space<vmem>>, vector<64x8xf32>
    %c0_11 = arith.constant 0 : index
    %c0_12 = arith.constant 0 : index
    %8 = vector.load %arg5[%c0_11, %c0_12] : memref<8x2xf32, #tpu.memory_space<vmem>>, vector<8x2xf32>
    %cst_13 = arith.constant dense<0.000000e+00> : vector<64x2xf32>
    %9 = tpu.matmul %7, %8, %cst_13 {dimension_numbers = #tpu.dot_dimension_numbers<[1], [0], [0], [1], [0, 0, 1, 1], [], []>} : vector<64x8xf32>, vector<8x2xf32>, vector<64x2xf32> -> vector<64x2xf32>
    %c0_14 = arith.constant 0 : index
    %c0_15 = arith.constant 0 : index
    %10 = vector.load %arg8[%c0_14, %c0_15] : memref<64x8xf32, #tpu.memory_space<vmem>>, vector<64x8xf32>
    %cst_16 = arith.constant dense<0.000000e+00> : vector<64x2xf32>
    %11 = tpu.matmul %10, %6, %cst_16 {dimension_numbers = #tpu.dot_dimension_numbers<[1], [0], [0], [1], [0, 0, 1, 1], [], []>} : vector<64x8xf32>, vector<8x2xf32>, vector<64x2xf32> -> vector<64x2xf32>
    %12 = arith.addf %9, %11 : vector<64x2xf32>
    %13 = vector.shape_cast %12 : vector<64x2xf32> to vector<8x8x2xf32>
    %14 = vector.shape_cast %4 : vector<8x2xf32> to vector<1x8x2xf32>
    %15 = vector.broadcast %14 : vector<1x8x2xf32> to vector<8x8x2xf32>
    %16 = arith.addf %13, %15 : vector<8x8x2xf32>
    %cst_17 = arith.constant 0.000000e+00 : f32
    %17 = vector.broadcast %cst_17 : f32 to vector<8x8x2xf32>
    %18 = arith.cmpf oge, %16, %17 : vector<8x8x2xf32>
    %cst_18 = arith.constant 2.000000e-01 : f32
    %19 = vector.broadcast %cst_18 : f32 to vector<8x8x2xf32>
    %20 = arith.mulf %19, %16 : vector<8x8x2xf32>
    %21 = arith.select %18, %16, %20 : vector<8x8x2xi1>, vector<8x8x2xf32>
    %c0_19 = arith.constant 0 : index
    %c0_20 = arith.constant 0 : index
    %c0_21 = arith.constant 0 : index
    %22 = vector.load %arg3[%c0_19, %c0_20, %c0_21] : memref<8x8x2xf32, #tpu.memory_space<vmem>>, vector<8x8x2xf32>
    %23 = arith.addf %21, %22 : vector<8x8x2xf32>
    %c0_22 = arith.constant 0 : index
    %c0_23 = arith.constant 0 : index
    %24 = vector.load %arg9[%c0_22, %c0_23] : memref<2x2xf32, #tpu.memory_space<vmem>>, vector<2x2xf32>
    %c0_24 = arith.constant 0 : index
    %c0_25 = arith.constant 0 : index
    %25 = vector.load %arg10[%c0_24, %c0_25] : memref<2x32xf32, #tpu.memory_space<vmem>>, vector<2x32xf32>
    %cst_26 = arith.constant 0.000000e+00 : f32
    %26 = vector.broadcast %cst_26 : f32 to vector<8x32xf32>
    %27 = vector.extract_strided_slice %24 {offsets = [0, 0], sizes = [1, 2], strides = [1, 1]} : vector<2x2xf32> to vector<1x2xf32>
    %28 = vector.shape_cast %27 : vector<1x2xf32> to vector<2xf32>
    %29 = vector.shape_cast %28 : vector<2xf32> to vector<1x1x2xf32>
    %30 = vector.broadcast %29 : vector<1x1x2xf32> to vector<8x8x2xf32>
    %31 = arith.mulf %23, %30 : vector<8x8x2xf32>
    %cst_27 = arith.constant dense<0.000000e+00> : vector<8x8xf32>
    %32 = vector.multi_reduction <add>, %31, %cst_27 [2] : vector<8x8x2xf32> to vector<8x8xf32>
    %cst_28 = arith.constant dense<0xFF800000> : vector<8xf32>
    %33 = vector.multi_reduction <maximumf>, %32, %cst_28 [1] : vector<8x8xf32> to vector<8xf32>
    %34 = vector.shape_cast %33 : vector<8xf32> to vector<8x1xf32>
    %35 = vector.broadcast %34 : vector<8x1xf32> to vector<8x8xf32>
    %36 = arith.subf %32, %35 : vector<8x8xf32>
    %37 = math.exp %36 : vector<8x8xf32>
    %cst_29 = arith.constant dense<0.000000e+00> : vector<8xf32>
    %38 = vector.multi_reduction <add>, %37, %cst_29 [1] : vector<8x8xf32> to vector<8xf32>
    %39 = vector.shape_cast %38 : vector<8xf32> to vector<8x1xf32>
    %cst_30 = arith.constant 9.99999971E-10 : f32
    %40 = vector.broadcast %cst_30 : f32 to vector<8x1xf32>
    %41 = arith.maximumf %39, %40 : vector<8x1xf32>
    %42 = tpu.reciprocal %41 {approx = true} : vector<8x1xf32> -> vector<8x1xf32>
    %43 = vector.broadcast %42 : vector<8x1xf32> to vector<8x8xf32>
    %44 = arith.mulf %37, %43 : vector<8x8xf32>
    %45 = vector.extract_strided_slice %25 {offsets = [0, 0], sizes = [1, 32], strides = [1, 1]} : vector<2x32xf32> to vector<1x32xf32>
    %46 = vector.shape_cast %45 : vector<1x32xf32> to vector<32xf32>
    %47 = vector.shape_cast %46 : vector<32xf32> to vector<1x32xf32>
    %48 = vector.broadcast %47 : vector<1x32xf32> to vector<8x32xf32>
    %49 = arith.mulf %2, %48 : vector<8x32xf32>
    %cst_31 = arith.constant dense<0.000000e+00> : vector<8x32xf32>
    %50 = tpu.matmul %44, %49, %cst_31 {dimension_numbers = #tpu.dot_dimension_numbers<[1], [0], [0], [1], [0, 0, 1, 1], [], []>} : vector<8x8xf32>, vector<8x32xf32>, vector<8x32xf32> -> vector<8x32xf32>
    %51 = arith.addf %26, %50 : vector<8x32xf32>
    %52 = vector.extract_strided_slice %24 {offsets = [1, 0], sizes = [1, 2], strides = [1, 1]} : vector<2x2xf32> to vector<1x2xf32>
    %53 = vector.shape_cast %52 : vector<1x2xf32> to vector<2xf32>
    %54 = vector.shape_cast %53 : vector<2xf32> to vector<1x1x2xf32>
    %55 = vector.broadcast %54 : vector<1x1x2xf32> to vector<8x8x2xf32>
    %56 = arith.mulf %23, %55 : vector<8x8x2xf32>
    %cst_32 = arith.constant dense<0.000000e+00> : vector<8x8xf32>
    %57 = vector.multi_reduction <add>, %56, %cst_32 [2] : vector<8x8x2xf32> to vector<8x8xf32>
    %cst_33 = arith.constant dense<0xFF800000> : vector<8xf32>
    %58 = vector.multi_reduction <maximumf>, %57, %cst_33 [1] : vector<8x8xf32> to vector<8xf32>
    %59 = vector.shape_cast %58 : vector<8xf32> to vector<8x1xf32>
    %60 = vector.broadcast %59 : vector<8x1xf32> to vector<8x8xf32>
    %61 = arith.subf %57, %60 : vector<8x8xf32>
    %62 = math.exp %61 : vector<8x8xf32>
    %cst_34 = arith.constant dense<0.000000e+00> : vector<8xf32>
    %63 = vector.multi_reduction <add>, %62, %cst_34 [1] : vector<8x8xf32> to vector<8xf32>
    %64 = vector.shape_cast %63 : vector<8xf32> to vector<8x1xf32>
    %cst_35 = arith.constant 9.99999971E-10 : f32
    %65 = vector.broadcast %cst_35 : f32 to vector<8x1xf32>
    %66 = arith.maximumf %64, %65 : vector<8x1xf32>
    %67 = tpu.reciprocal %66 {approx = true} : vector<8x1xf32> -> vector<8x1xf32>
    %68 = vector.broadcast %67 : vector<8x1xf32> to vector<8x8xf32>
    %69 = arith.mulf %62, %68 : vector<8x8xf32>
    %70 = vector.extract_strided_slice %25 {offsets = [1, 0], sizes = [1, 32], strides = [1, 1]} : vector<2x32xf32> to vector<1x32xf32>
    %71 = vector.shape_cast %70 : vector<1x32xf32> to vector<32xf32>
    %72 = vector.shape_cast %71 : vector<32xf32> to vector<1x32xf32>
    %73 = vector.broadcast %72 : vector<1x32xf32> to vector<8x32xf32>
    %74 = arith.mulf %2, %73 : vector<8x32xf32>
    %cst_36 = arith.constant dense<0.000000e+00> : vector<8x32xf32>
    %75 = tpu.matmul %69, %74, %cst_36 {dimension_numbers = #tpu.dot_dimension_numbers<[1], [0], [0], [1], [0, 0, 1, 1], [], []>} : vector<8x8xf32>, vector<8x32xf32>, vector<8x32xf32> -> vector<8x32xf32>
    %76 = arith.addf %51, %75 : vector<8x32xf32>
    %cst_37 = arith.constant 0.000000e+00 : f32
    %77 = vector.broadcast %cst_37 : f32 to vector<8x32xf32>
    %78 = arith.cmpf ogt, %76, %77 : vector<8x32xf32>
    %79 = math.exp %76 : vector<8x32xf32>
    %cst_38 = arith.constant 1.000000e+00 : f32
    %80 = vector.broadcast %cst_38 : f32 to vector<8x32xf32>
    %81 = arith.subf %79, %80 : vector<8x32xf32>
    %82 = arith.select %78, %76, %81 : vector<8x32xi1>, vector<8x32xf32>
    %c0_39 = arith.constant 0 : index
    %c0_40 = arith.constant 0 : index
    %83 = vector.load %arg11[%c0_39, %c0_40] : memref<8x32xf32, #tpu.memory_space<vmem>>, vector<8x32xf32>
    tpu.vector_store %arg11[%c0_39, %c0_40], %82 {strides = array<i32>} : memref<8x32xf32, #tpu.memory_space<vmem>>, vector<8x32xf32>,
    return
  }
  func.func @transform_0(%arg0: i32) -> (i32, i32) {
    %c0_i32 = arith.constant 0 : i32
    %c0_i32_0 = arith.constant 0 : i32
    %c0_i32_1 = arith.constant 0 : i32
    return %c0_i32, %c0_i32_0 : i32, i32
  }
  func.func @transform_1(%arg0: i32) -> (i32, i32) {
    %c0_i32 = arith.constant 0 : i32
    %c0_i32_0 = arith.constant 0 : i32
    %c0_i32_1 = arith.constant 0 : i32
    return %c0_i32, %c0_i32_0 : i32, i32
  }
  func.func @transform_2(%arg0: i32) -> (i32, i32, i32) {
    %c0_i32 = arith.constant 0 : i32
    %c0_i32_0 = arith.constant 0 : i32
    %c0_i32_1 = arith.constant 0 : i32
    %c0_i32_2 = arith.constant 0 : i32
    return %c0_i32, %c0_i32_0, %c0_i32_1 : i32, i32, i32
  }
  func.func @transform_3(%arg0: i32) -> (i32, i32) {
    %c0_i32 = arith.constant 0 : i32
    %c0_i32_0 = arith.constant 0 : i32
    %c0_i32_1 = arith.constant 0 : i32
    return %c0_i32, %c0_i32_0 : i32, i32
  }
  func.func @transform_4(%arg0: i32) -> (i32, i32) {
    %c0_i32 = arith.constant 0 : i32
    %c0_i32_0 = arith.constant 0 : i32
    %c0_i32_1 = arith.constant 0 : i32
    return %c0_i32, %c0_i32_0 : i32, i32
  }
  func.func @transform_5(%arg0: i32) -> (i32, i32) {
    %c0_i32 = arith.constant 0 : i32
    %c0_i32_0 = arith.constant 0 : i32
    %c0_i32_1 = arith.constant 0 : i32
    return %c0_i32, %c0_i32_0 : i32, i32
  }
  func.func @transform_6(%arg0: i32) -> (i32, i32) {
    %c0_i32 = arith.constant 0 : i32
    %c0_i32_0 = arith.constant 0 : i32
    %c0_i32_1 = arith.constant 0 : i32
    return %c0_i32, %c0_i32_0 : i32, i32
  }
  func.func @transform_7(%arg0: i32) -> (i32, i32) {
    %c0_i32 = arith.constant 0 : i32
    %c0_i32_0 = arith.constant 0 : i32
    %c0_i32_1 = arith.constant 0 : i32
    return %c0_i32, %c0_i32_0 : i32, i32
  }
  func.func @transform_8(%arg0: i32) -> (i32, i32) {
    %c0_i32 = arith.constant 0 : i32
    %c0_i32_0 = arith.constant 0 : i32
    %c0_i32_1 = arith.constant 0 : i32
    return %c0_i32, %c0_i32_0 : i32, i32
  }
  func.func @transform_9(%arg0: i32) -> (i32, i32) {
    %c0_i32 = arith.constant 0 : i32
    %c0_i32_0 = arith.constant 0 : i32
    %c0_i32_1 = arith.constant 0 : i32
    return %c0_i32, %c0_i32_0 : i32, i32
  }
  func.func @transform_10(%arg0: i32) -> (i32, i32) {
    %c0_i32 = arith.constant 0 : i32
    %c0_i32_0 = arith.constant 0 : i32
    %c0_i32_1 = arith.constant 0 : i32
    return %c0_i32, %c0_i32_0 : i32, i32
  }
}

</mosaic_0001>

<llo_original>
// kernel: tpu_custom_call.1
$region0: #{tpu_custom_call.1}
  #allocation0 [shape = 'u32[]', space=smem, size = 0x4, offset = 0x4, fixed_abs, tag = 'smem constant byte address 0x4 - core index']
  #allocation1 [shape = 'u32[144,128]{1,0:T(1,128)}', space=vmem, size = 0x12000, scoped, tag = 'internal scratch']
  %s0 = inlined_call_operand.vmem [shape: f32[8,16], index: 0, kind: input, shape index: {}]
  %s1 = inlined_call_operand.vmem [shape: f32[64,8], index: 1, kind: input, shape index: {}]
  %s2 = inlined_call_operand.vmem [shape: f32[8,8,2], index: 2, kind: input, shape index: {}]
  %s3 = inlined_call_operand.vmem [shape: f32[16,32], index: 3, kind: input, shape index: {}]
  %s4 = inlined_call_operand.vmem [shape: f32[8,2], index: 4, kind: input, shape index: {}]
  %s5 = inlined_call_operand.vmem [shape: f32[32,2], index: 5, kind: input, shape index: {}]
  %s6 = inlined_call_operand.vmem [shape: f32[32,2], index: 6, kind: input, shape index: {}]
  %s7 = inlined_call_operand.vmem [shape: f32[64,8], index: 7, kind: input, shape index: {}]
  %s8 = inlined_call_operand.vmem [shape: f32[2,2], index: 8, kind: input, shape index: {}]
  %s9 = inlined_call_operand.vmem [shape: f32[2,32], index: 9, kind: input, shape index: {}]
  %s10 = inlined_call_operand.hbm [shape: f32[8,32], index: 10, kind: output, shape index: {}]
  %s11 = sld [smem:[#allocation0]]
  $region50: #{tpu_custom_call.1} parent=0
    _
  %s13 = ssub.s32 1, %s11
  %s14 = scalar_select 0, %s13, %s11
  $region1: #{tpu_custom_call.1} parent=0
    #allocation2 [shape = 'u8[4096]{0}', space=vmem, size = 0x1000, scoped, tag = 'output window, operand 0, single buffered']
    #allocation3 [shape = 's32[1]{0}', space=sflag, size = 0x4, scoped, tag = 'scoped memory for tpu_custom_call.1']
    %15 = vsyncpa [#allocation3], 0
    // Predicated region
    $region2: #{tpu_custom_call.1} parent=1 // pred_check
      _
    $region3: #{tpu_custom_call.1} parent=1 // pred_check_branch
      %17 = sbr.rel (0) target = $region5
    $region4: #{tpu_custom_call.1} parent=1 // pred_region
      _
    $region5: #{tpu_custom_call.1} parent=1 // pred_fallthru
      _
    // Predicated region
    $region6: #{tpu_custom_call.1} parent=1 // pred_check
      _
    $region7: #{tpu_custom_call.1} parent=1 // pred_check_branch
      %19 = sbr.rel (0) target = $region9
    $region8: #{tpu_custom_call.1} parent=1 // pred_region
      _
    $region9: #{tpu_custom_call.1} parent=1 // pred_fallthru
      _
    // Predicated region
    $region10: #{tpu_custom_call.1} parent=1 // pred_check
      _
    $region11: #{tpu_custom_call.1} parent=1 // pred_check_branch
      %21 = sbr.rel (0) target = $region13
    $region12: #{tpu_custom_call.1} parent=1 // pred_region
      _
    $region13: #{tpu_custom_call.1} parent=1 // pred_fallthru
      _
    // Predicated region
    $region14: #{tpu_custom_call.1} parent=1 // pred_check
      _
    $region15: #{tpu_custom_call.1} parent=1 // pred_check_branch
      %23 = sbr.rel (0) target = $region17
    $region16: #{tpu_custom_call.1} parent=1 // pred_region
      _
    $region17: #{tpu_custom_call.1} parent=1 // pred_fallthru
      _
    // Predicated region
    $region18: #{tpu_custom_call.1} parent=1 // pred_check
      _
    $region19: #{tpu_custom_call.1} parent=1 // pred_check_branch
      %25 = sbr.rel (0) target = $region21
    $region20: #{tpu_custom_call.1} parent=1 // pred_region
      _
    $region21: #{tpu_custom_call.1} parent=1 // pred_fallthru
      _
    // Predicated region
    $region22: #{tpu_custom_call.1} parent=1 // pred_check
      _
    $region23: #{tpu_custom_call.1} parent=1 // pred_check_branch
      %27 = sbr.rel (0) target = $region25
    $region24: #{tpu_custom_call.1} parent=1 // pred_region
      _
    $region25: #{tpu_custom_call.1} parent=1 // pred_fallthru
      _
    // Predicated region
    $region26: #{tpu_custom_call.1} parent=1 // pred_check
      _
    $region27: #{tpu_custom_call.1} parent=1 // pred_check_branch
      %29 = sbr.rel (0) target = $region29
    $region28: #{tpu_custom_call.1} parent=1 // pred_region
      _
    $region29: #{tpu_custom_call.1} parent=1 // pred_fallthru
      _
    // Predicated region
    $region30: #{tpu_custom_call.1} parent=1 // pred_check
      _
    $region31: #{tpu_custom_call.1} parent=1 // pred_check_branch
      %31 = sbr.rel (0) target = $region33
    $region32: #{tpu_custom_call.1} parent=1 // pred_region
      _
    $region33: #{tpu_custom_call.1} parent=1 // pred_fallthru
      _
    // Predicated region
    $region34: #{tpu_custom_call.1} parent=1 // pred_check
      _
    $region35: #{tpu_custom_call.1} parent=1 // pred_check_branch
      %33 = sbr.rel (0) target = $region37
    $region36: #{tpu_custom_call.1} parent=1 // pred_region
      _
    $region37: #{tpu_custom_call.1} parent=1 // pred_fallthru
      _
    // Predicated region
    $region38: #{tpu_custom_call.1} parent=1 // pred_check
      _
    $region39: #{tpu_custom_call.1} parent=1 // pred_check_branch
      %35 = sbr.rel (0) target = $region41
    $region40: #{tpu_custom_call.1} parent=1 // pred_region
      _
    $region41: #{tpu_custom_call.1} parent=1 // pred_fallthru
      _
    %v36 = vld [vmem:[%s0] sm:$0xff]
    %v37 = vld [vmem:[%s3] sm:$0xff]
    %v38 = vld [vmem:[%s3 + $0x8] sm:$0xff]
    %vm39 = vcmask 130048
    %v41 = vsel %vm39, %v36, 0
    %43 = vmatprep.subr.mxu0 0.0
    %44 = vmatpush1.msra.mxu0 %v37
    %45 = vmatprep.subr.mxu0 0.0
    %46 = vmatpush1.msra.mxu0 %v38
    %47 = vmatprep.subr.mxu0 0.0
    %48 = vmatpush1.msra.mxu0 0.0
    %49 = vmatprep.subr.mxu0 0.0
    %50 = vmatpush1.msra.mxu0 0.0
    %51 = vmatprep.subr.mxu0 0.0
    %52 = vmatpush1.msra.mxu0 0.0
    %53 = vmatprep.subr.mxu0 0.0
    %54 = vmatpush1.msra.mxu0 0.0
    %55 = vmatprep.subr.mxu0 0.0
    %56 = vmatpush1.msra.mxu0 0.0
    %57 = vmatprep.subr.mxu0 0.0
    %58 = vmatpush1.msra.mxu0 0.0
    %59 = vmatprep.subr.mxu0 0.0
    %60 = vmatpush1.msra.mxu0 0.0
    %61 = vmatprep.subr.mxu0 0.0
    %62 = vmatpush1.msra.mxu0 0.0
    %63 = vmatprep.subr.mxu0 0.0
    %64 = vmatpush1.msra.mxu0 0.0
    %65 = vmatprep.subr.mxu0 0.0
    %66 = vmatpush1.msra.mxu0 0.0
    %67 = vmatprep.subr.mxu0 0.0
    %68 = vmatpush1.msra.mxu0 0.0
    %69 = vmatprep.subr.mxu0 0.0
    %70 = vmatpush1.msra.mxu0 0.0
    %71 = vmatprep.subr.mxu0 0.0
    %72 = vmatpush1.msra.mxu0 0.0
    %73 = vmatprep.subr.mxu0 0.0
    %74 = vmatpush1.msra.mxu0 0.0
    %75 = vmatprep.subr.mxu0 0.0
    %76 = vmatpush1.msra.mxu0 0.0
    %77 = vmatprep.subr.mxu0 0.0
    %78 = vmatpush1.msra.mxu0 0.0
    %79 = vmatprep.subr.mxu0 0.0
    %80 = vmatpush1.msra.mxu0 0.0
    %81 = vmatprep.subr.mxu0 0.0
    %82 = vmatpush1.msra.mxu0 0.0
    %83 = vmatprep.subr.mxu0 0.0
    %84 = vmatpush1.msra.mxu0 0.0
    %85 = vmatprep.subr.mxu0 0.0
    %86 = vmatpush1.msra.mxu0 0.0
    %87 = vmatprep.subr.mxu0 0.0
    %88 = vmatpush1.msra.mxu0 0.0
    %89 = vmatprep.subr.mxu0 0.0
    %90 = vmatpush1.msra.mxu0 0.0
    %91 = vmatprep.subr.mxu0 0.0
    %92 = vmatpush1.msra.mxu0 0.0
    %93 = vmatprep.subr.mxu0 0.0
    %94 = vmatpush1.msra.mxu0 0.0
    %95 = vmatprep.subr.mxu0 0.0
    %96 = vmatpush1.msra.mxu0 0.0
    %97 = vmatprep.subr.mxu0 0.0
    %98 = vmatpush1.msra.mxu0 0.0
    %99 = vmatprep.subr.mxu0 0.0
    %100 = vmatpush1.msra.mxu0 0.0
    %101 = vmatprep.subr.mxu0 0.0
    %102 = vmatpush1.msra.mxu0 0.0
    %103 = vmatprep.subr.mxu0 0.0
    %104 = vmatpush1.msra.mxu0 0.0
    %105 = vmatprep.subr.mxu0 0.0
    %106 = vmatpush1.msra.mxu0 0.0
    %107 = vmatprep.mubr.f32.mxu0 0.0
    %108 = vmatmul.mubr.f32.gmra.mrb[0].mxu0 %v41
    %v109 = vpop.f32.mrb[0].mxu0
    %v110 = vadd.f32 0.0, %v109
    %v111 = vpop.f32.mrb[0].mxu0
    %112 = vdwg.mxu0
    %v113 = vld [vmem:[%s5] sm:$0xff]
    %v114 = vld [vmem:[%s5 + $0x8] sm:$0xff]
    %v115 = vld [vmem:[%s5 + $0x10] sm:$0xff]
    %v116 = vld [vmem:[%s5 + $0x18] sm:$0xff]
    %vm117 = vcmask 261120
    %v119 = vsel %vm117, %v110, 0
    %121 = vmatprep.subr.mxu0 0.0
    %122 = vmatpush1.msra.mxu0 %v113
    %123 = vmatprep.subr.mxu0 0.0
    %124 = vmatpush1.msra.mxu0 %v114
    %125 = vmatprep.subr.mxu0 0.0
    %126 = vmatpush1.msra.mxu0 %v115
    %127 = vmatprep.subr.mxu0 0.0
    %128 = vmatpush1.msra.mxu0 %v116
    %129 = vmatprep.subr.mxu0 0.0
    %130 = vmatpush1.msra.mxu0 0.0
    %131 = vmatprep.subr.mxu0 0.0
    %132 = vmatpush1.msra.mxu0 0.0
    %133 = vmatprep.subr.mxu0 0.0
    %134 = vmatpush1.msra.mxu0 0.0
    %135 = vmatprep.subr.mxu0 0.0
    %136 = vmatpush1.msra.mxu0 0.0
    %137 = vmatprep.subr.mxu0 0.0
    %138 = vmatpush1.msra.mxu0 0.0
    %139 = vmatprep.subr.mxu0 0.0
    %140 = vmatpush1.msra.mxu0 0.0
    %141 = vmatprep.subr.mxu0 0.0
    %142 = vmatpush1.msra.mxu0 0.0
    %143 = vmatprep.subr.mxu0 0.0
    %144 = vmatpush1.msra.mxu0 0.0
    %145 = vmatprep.subr.mxu0 0.0
    %146 = vmatpush1.msra.mxu0 0.0
    %147 = vmatprep.subr.mxu0 0.0
    %148 = vmatpush1.msra.mxu0 0.0
    %149 = vmatprep.subr.mxu0 0.0
    %150 = vmatpush1.msra.mxu0 0.0
    %151 = vmatprep.subr.mxu0 0.0
    %152 = vmatpush1.msra.mxu0 0.0
    %153 = vmatprep.subr.mxu0 0.0
    %154 = vmatpush1.msra.mxu0 0.0
    %155 = vmatprep.subr.mxu0 0.0
    %156 = vmatpush1.msra.mxu0 0.0
    %157 = vmatprep.subr.mxu0 0.0
    %158 = vmatpush1.msra.mxu0 0.0
    %159 = vmatprep.subr.mxu0 0.0
    %160 = vmatpush1.msra.mxu0 0.0
    %161 = vmatprep.subr.mxu0 0.0
    %162 = vmatpush1.msra.mxu0 0.0
    %163 = vmatprep.subr.mxu0 0.0
    %164 = vmatpush1.msra.mxu0 0.0
    %165 = vmatprep.subr.mxu0 0.0
    %166 = vmatpush1.msra.mxu0 0.0
    %167 = vmatprep.subr.mxu0 0.0
    %168 = vmatpush1.msra.mxu0 0.0
    %169 = vmatprep.subr.mxu0 0.0
    %170 = vmatpush1.msra.mxu0 0.0
    %171 = vmatprep.subr.mxu0 0.0
    %172 = vmatpush1.msra.mxu0 0.0
    %173 = vmatprep.subr.mxu0 0.0
    %174 = vmatpush1.msra.mxu0 0.0
    %175 = vmatprep.subr.mxu0 0.0
    %176 = vmatpush1.msra.mxu0 0.0
    %177 = vmatprep.subr.mxu0 0.0
    %178 = vmatpush1.msra.mxu0 0.0
    %179 = vmatprep.subr.mxu0 0.0
    %180 = vmatpush1.msra.mxu0 0.0
    %181 = vmatprep.subr.mxu0 0.0
    %182 = vmatpush1.msra.mxu0 0.0
    %183 = vmatprep.subr.mxu0 0.0
    %184 = vmatpush1.msra.mxu0 0.0
    %185 = vmatprep.mubr.f32.mxu0 0.0
    %186 = vmatmul.mubr.f32.gmra.mrb[0].mxu0 %v119
    %v187 = vpop.f32.mrb[0].mxu0
    %v188 = vadd.f32 0.0, %v187
    %v189 = vpop.f32.mrb[0].mxu0
    %190 = vdwg.mxu0
    %v191 = vld [vmem:[%s6] sm:$0xff]
    %v192 = vld [vmem:[%s6 + $0x8] sm:$0xff]
    %v193 = vld [vmem:[%s6 + $0x10] sm:$0xff]
    %v194 = vld [vmem:[%s6 + $0x18] sm:$0xff]
    %195 = vmatprep.subr.mxu0 0.0
    %196 = vmatpush1.msra.mxu0 %v191
    %197 = vmatprep.subr.mxu0 0.0
    %198 = vmatpush1.msra.mxu0 %v192
    %199 = vmatprep.subr.mxu0 0.0
    %200 = vmatpush1.msra.mxu0 %v193
    %201 = vmatprep.subr.mxu0 0.0
    %202 = vmatpush1.msra.mxu0 %v194
    %203 = vmatprep.subr.mxu0 0.0
    %204 = vmatpush1.msra.mxu0 0.0
    %205 = vmatprep.subr.mxu0 0.0
    %206 = vmatpush1.msra.mxu0 0.0
    %207 = vmatprep.subr.mxu0 0.0
    %208 = vmatpush1.msra.mxu0 0.0
    %209 = vmatprep.subr.mxu0 0.0
    %210 = vmatpush1.msra.mxu0 0.0
    %211 = vmatprep.subr.mxu0 0.0
    %212 = vmatpush1.msra.mxu0 0.0
    %213 = vmatprep.subr.mxu0 0.0
    %214 = vmatpush1.msra.mxu0 0.0
    %215 = vmatprep.subr.mxu0 0.0
    %216 = vmatpush1.msra.mxu0 0.0
    %217 = vmatprep.subr.mxu0 0.0
    %218 = vmatpush1.msra.mxu0 0.0
    %219 = vmatprep.subr.mxu0 0.0
    %220 = vmatpush1.msra.mxu0 0.0
    %221 = vmatprep.subr.mxu0 0.0
    %222 = vmatpush1.msra.mxu0 0.0
    %223 = vmatprep.subr.mxu0 0.0
    %224 = vmatpush1.msra.mxu0 0.0
    %225 = vmatprep.subr.mxu0 0.0
    %226 = vmatpush1.msra.mxu0 0.0
    %227 = vmatprep.subr.mxu0 0.0
    %228 = vmatpush1.msra.mxu0 0.0
    %229 = vmatprep.subr.mxu0 0.0
    %230 = vmatpush1.msra.mxu0 0.0
    %231 = vmatprep.subr.mxu0 0.0
    %232 = vmatpush1.msra.mxu0 0.0
    %233 = vmatprep.subr.mxu0 0.0
    %234 = vmatpush1.msra.mxu0 0.0
    %235 = vmatprep.subr.mxu0 0.0
    %236 = vmatpush1.msra.mxu0 0.0
    %237 = vmatprep.subr.mxu0 0.0
    %238 = vmatpush1.msra.mxu0 0.0
    %239 = vmatprep.subr.mxu0 0.0
    %240 = vmatpush1.msra.mxu0 0.0
    %241 = vmatprep.subr.mxu0 0.0
    %242 = vmatpush1.msra.mxu0 0.0
    %243 = vmatprep.subr.mxu0 0.0
    %244 = vmatpush1.msra.mxu0 0.0
    %245 = vmatprep.subr.mxu0 0.0
    %246 = vmatpush1.msra.mxu0 0.0
    %247 = vmatprep.subr.mxu0 0.0
    %248 = vmatpush1.msra.mxu0 0.0
    %249 = vmatprep.subr.mxu0 0.0
    %250 = vmatpush1.msra.mxu0 0.0
    %251 = vmatprep.subr.mxu0 0.0
    %252 = vmatpush1.msra.mxu0 0.0
    %253 = vmatprep.subr.mxu0 0.0
    %254 = vmatpush1.msra.mxu0 0.0
    %255 = vmatprep.subr.mxu0 0.0
    %256 = vmatpush1.msra.mxu0 0.0
    %257 = vmatprep.subr.mxu0 0.0
    %258 = vmatpush1.msra.mxu0 0.0
    %259 = vmatprep.mubr.f32.mxu0 0.0
    %260 = vmatmul.mubr.f32.gmra.mrb[0].mxu0 %v119
    %v261 = vpop.f32.mrb[0].mxu0
    %v262 = vadd.f32 0.0, %v261
    %v263 = vpop.f32.mrb[0].mxu0
    %264 = vdwg.mxu0
    %v265 = vld [vmem:[%s1] sm:$0xff]
    %v266 = vld [vmem:[%s1 + $0x8] sm:$0xff]
    %v267 = vld [vmem:[%s1 + $0x10] sm:$0xff]
    %v268 = vld [vmem:[%s1 + $0x18] sm:$0xff]
    %v269 = vld [vmem:[%s1 + $0x20] sm:$0xff]
    %v270 = vld [vmem:[%s1 + $0x28] sm:$0xff]
    %v271 = vld [vmem:[%s1 + $0x30] sm:$0xff]
    %v272 = vld [vmem:[%s1 + $0x38] sm:$0xff]
    %v273 = vld [vmem:[%s4] sm:$0xff]
    %v274 = vld [vmem:[%s7] sm:$0xff]
    %v275 = vld [vmem:[%s7 + $0x8] sm:$0xff]
    %v276 = vld [vmem:[%s7 + $0x10] sm:$0xff]
    %v277 = vld [vmem:[%s7 + $0x18] sm:$0xff]
    %v278 = vld [vmem:[%s7 + $0x20] sm:$0xff]
    %v279 = vld [vmem:[%s7 + $0x28] sm:$0xff]
    %v280 = vld [vmem:[%s7 + $0x30] sm:$0xff]
    %v281 = vld [vmem:[%s7 + $0x38] sm:$0xff]
    %vm282 = vcmask 64512
    %v284 = vsel %vm282, %v274, 0
    %v287 = vsel %vm282, %v275, 0
    %v290 = vsel %vm282, %v276, 0
    %v293 = vsel %vm282, %v277, 0
    %v296 = vsel %vm282, %v278, 0
    %v299 = vsel %vm282, %v279, 0
    %v302 = vsel %vm282, %v280, 0
    %v305 = vsel %vm282, %v281, 0
    %307 = vmatprep.subr.mxu0 0.0
    %308 = vmatpush1.msra.mxu0 %v262
    %309 = vmatprep.subr.mxu0 0.0
    %310 = vmatpush1.msra.mxu0 0.0
    %311 = vmatprep.subr.mxu0 0.0
    %312 = vmatpush1.msra.mxu0 0.0
    %313 = vmatprep.subr.mxu0 0.0
    %314 = vmatpush1.msra.mxu0 0.0
    %315 = vmatprep.subr.mxu0 0.0
    %316 = vmatpush1.msra.mxu0 0.0
    %317 = vmatprep.subr.mxu0 0.0
    %318 = vmatpush1.msra.mxu0 0.0
    %319 = vmatprep.subr.mxu0 0.0
    %320 = vmatpush1.msra.mxu0 0.0
    %321 = vmatprep.subr.mxu0 0.0
    %322 = vmatpush1.msra.mxu0 0.0
    %323 = vmatprep.subr.mxu0 0.0
    %324 = vmatpush1.msra.mxu0 0.0
    %325 = vmatprep.subr.mxu0 0.0
    %326 = vmatpush1.msra.mxu0 0.0
    %327 = vmatprep.subr.mxu0 0.0
    %328 = vmatpush1.msra.mxu0 0.0
    %329 = vmatprep.subr.mxu0 0.0
    %330 = vmatpush1.msra.mxu0 0.0
    %331 = vmatprep.subr.mxu0 0.0
    %332 = vmatpush1.msra.mxu0 0.0
    %333 = vmatprep.subr.mxu0 0.0
    %334 = vmatpush1.msra.mxu0 0.0
    %335 = vmatprep.subr.mxu0 0.0
    %336 = vmatpush1.msra.mxu0 0.0
    %337 = vmatprep.subr.mxu0 0.0
    %338 = vmatpush1.msra.mxu0 0.0
    %339 = vmatprep.subr.mxu0 0.0
    %340 = vmatpush1.msra.mxu0 0.0
    %341 = vmatprep.subr.mxu0 0.0
    %342 = vmatpush1.msra.mxu0 0.0
    %343 = vmatprep.subr.mxu0 0.0
    %344 = vmatpush1.msra.mxu0 0.0
    %345 = vmatprep.subr.mxu0 0.0
    %346 = vmatpush1.msra.mxu0 0.0
    %347 = vmatprep.subr.mxu0 0.0
    %348 = vmatpush1.msra.mxu0 0.0
    %349 = vmatprep.subr.mxu0 0.0
    %350 = vmatpush1.msra.mxu0 0.0
    %351 = vmatprep.subr.mxu0 0.0
    %352 = vmatpush1.msra.mxu0 0.0
    %353 = vmatprep.subr.mxu0 0.0
    %354 = vmatpush1.msra.mxu0 0.0
    %355 = vmatprep.subr.mxu0 0.0
    %356 = vmatpush1.msra.mxu0 0.0
    %357 = vmatprep.subr.mxu0 0.0
    %358 = vmatpush1.msra.mxu0 0.0
    %359 = vmatprep.subr.mxu0 0.0
    %360 = vmatpush1.msra.mxu0 0.0
    %361 = vmatprep.subr.mxu0 0.0
    %362 = vmatpush1.msra.mxu0 0.0
    %363 = vmatprep.subr.mxu0 0.0
    %364 = vmatpush1.msra.mxu0 0.0
    %365 = vmatprep.subr.mxu0 0.0
    %366 = vmatpush1.msra.mxu0 0.0
    %367 = vmatprep.subr.mxu0 0.0
    %368 = vmatpush1.msra.mxu0 0.0
    %369 = vmatprep.subr.mxu0 0.0
    %370 = vmatpush1.msra.mxu0 0.0
    %371 = vmatprep.mubr.f32.mxu0 0.0
    %372 = vmatmul.mubr.f32.gmra.mrb[0].mxu0 %v284
    %v373 = vpop.f32.mrb[0].mxu0
    %v374 = vadd.f32 0.0, %v373
    %v375 = vpop.f32.mrb[0].mxu0
    %376 = vmatprep.mubr.f32.mxu0 0.0
    %377 = vmatmul.mubr.f32.gmra.mrb[0].mxu0 %v287
    %v378 = vpop.f32.mrb[0].mxu0
    %v379 = vadd.f32 0.0, %v378
    %v380 = vpop.f32.mrb[0].mxu0
    %381 = vmatprep.mubr.f32.mxu0 0.0
    %382 = vmatmul.mubr.f32.gmra.mrb[0].mxu0 %v290
    %v383 = vpop.f32.mrb[0].mxu0
    %v384 = vadd.f32 0.0, %v383
    %v385 = vpop.f32.mrb[0].mxu0
    %386 = vmatprep.mubr.f32.mxu0 0.0
    %387 = vmatmul.mubr.f32.gmra.mrb[0].mxu0 %v293
    %v388 = vpop.f32.mrb[0].mxu0
    %v389 = vadd.f32 0.0, %v388
    %v390 = vpop.f32.mrb[0].mxu0
    %391 = vmatprep.mubr.f32.mxu0 0.0
    %392 = vmatmul.mubr.f32.gmra.mrb[0].mxu0 %v296
    %v393 = vpop.f32.mrb[0].mxu0
    %v394 = vadd.f32 0.0, %v393
    %v395 = vpop.f32.mrb[0].mxu0
    %396 = vmatprep.mubr.f32.mxu0 0.0
    %397 = vmatmul.mubr.f32.gmra.mrb[0].mxu0 %v299
    %v398 = vpop.f32.mrb[0].mxu0
    %v399 = vadd.f32 0.0, %v398
    %v400 = vpop.f32.mrb[0].mxu0
    %401 = vmatprep.mubr.f32.mxu0 0.0
    %402 = vmatmul.mubr.f32.gmra.mrb[0].mxu0 %v302
    %v403 = vpop.f32.mrb[0].mxu0
    %v404 = vadd.f32 0.0, %v403
    %v405 = vpop.f32.mrb[0].mxu0
    %406 = vmatprep.mubr.f32.mxu0 0.0
    %407 = vmatmul.mubr.f32.gmra.mrb[0].mxu0 %v305
    %v408 = vpop.f32.mrb[0].mxu0
    %v409 = vadd.f32 0.0, %v408
    %v410 = vpop.f32.mrb[0].mxu0
    %411 = vdwg.mxu0
    %v413 = vsel %vm282, %v265, 0
    %v416 = vsel %vm282, %v266, 0
    %v419 = vsel %vm282, %v267, 0
    %v422 = vsel %vm282, %v268, 0
    %v425 = vsel %vm282, %v269, 0
    %v428 = vsel %vm282, %v270, 0
    %v431 = vsel %vm282, %v271, 0
    %v434 = vsel %vm282, %v272, 0
    %436 = vmatprep.subr.mxu0 0.0
    %437 = vmatpush1.msra.mxu0 %v273
    %438 = vmatprep.subr.mxu0 0.0
    %439 = vmatpush1.msra.mxu0 0.0
    %440 = vmatprep.subr.mxu0 0.0
    %441 = vmatpush1.msra.mxu0 0.0
    %442 = vmatprep.subr.mxu0 0.0
    %443 = vmatpush1.msra.mxu0 0.0
    %444 = vmatprep.subr.mxu0 0.0
    %445 = vmatpush1.msra.mxu0 0.0
    %446 = vmatprep.subr.mxu0 0.0
    %447 = vmatpush1.msra.mxu0 0.0
    %448 = vmatprep.subr.mxu0 0.0
    %449 = vmatpush1.msra.mxu0 0.0
    %450 = vmatprep.subr.mxu0 0.0
    %451 = vmatpush1.msra.mxu0 0.0
    %452 = vmatprep.subr.mxu0 0.0
    %453 = vmatpush1.msra.mxu0 0.0
    %454 = vmatprep.subr.mxu0 0.0
    %455 = vmatpush1.msra.mxu0 0.0
    %456 = vmatprep.subr.mxu0 0.0
    %457 = vmatpush1.msra.mxu0 0.0
    %458 = vmatprep.subr.mxu0 0.0
    %459 = vmatpush1.msra.mxu0 0.0
    %460 = vmatprep.subr.mxu0 0.0
    %461 = vmatpush1.msra.mxu0 0.0
    %462 = vmatprep.subr.mxu0 0.0
    %463 = vmatpush1.msra.mxu0 0.0
    %464 = vmatprep.subr.mxu0 0.0
    %465 = vmatpush1.msra.mxu0 0.0
    %466 = vmatprep.subr.mxu0 0.0
    %467 = vmatpush1.msra.mxu0 0.0
    %468 = vmatprep.subr.mxu0 0.0
    %469 = vmatpush1.msra.mxu0 0.0
    %470 = vmatprep.subr.mxu0 0.0
    %471 = vmatpush1.msra.mxu0 0.0
    %472 = vmatprep.subr.mxu0 0.0
    %473 = vmatpush1.msra.mxu0 0.0
    %474 = vmatprep.subr.mxu0 0.0
    %475 = vmatpush1.msra.mxu0 0.0
    %476 = vmatprep.subr.mxu0 0.0
    %477 = vmatpush1.msra.mxu0 0.0
    %478 = vmatprep.subr.mxu0 0.0
    %479 = vmatpush1.msra.mxu0 0.0
    %480 = vmatprep.subr.mxu0 0.0
    %481 = vmatpush1.msra.mxu0 0.0
    %482 = vmatprep.subr.mxu0 0.0
    %483 = vmatpush1.msra.mxu0 0.0
    %484 = vmatprep.subr.mxu0 0.0
    %485 = vmatpush1.msra.mxu0 0.0
    %486 = vmatprep.subr.mxu0 0.0
    %487 = vmatpush1.msra.mxu0 0.0
    %488 = vmatprep.subr.mxu0 0.0
    %489 = vmatpush1.msra.mxu0 0.0
    %490 = vmatprep.subr.mxu0 0.0
    %491 = vmatpush1.msra.mxu0 0.0
    %492 = vmatprep.subr.mxu0 0.0
    %493 = vmatpush1.msra.mxu0 0.0
    %494 = vmatprep.subr.mxu0 0.0
    %495 = vmatpush1.msra.mxu0 0.0
    %496 = vmatprep.subr.mxu0 0.0
    %497 = vmatpush1.msra.mxu0 0.0
    %498 = vmatprep.subr.mxu0 0.0
    %499 = vmatpush1.msra.mxu0 0.0
    %500 = vmatprep.mubr.f32.mxu0 0.0
    %501 = vmatmul.mubr.f32.gmra.mrb[0].mxu0 %v413
    %v502 = vpop.f32.mrb[0].mxu0
    %v503 = vadd.f32 %v374, %v502
    %v504 = vpop.f32.mrb[0].mxu0
    %505 = vmatprep.mubr.f32.mxu0 0.0
    %506 = vmatmul.mubr.f32.gmra.mrb[0].mxu0 %v416
    %v507 = vpop.f32.mrb[0].mxu0
    %v508 = vadd.f32 %v379, %v507
    %v509 = vpop.f32.mrb[0].mxu0
    %510 = vmatprep.mubr.f32.mxu0 0.0
    %511 = vmatmul.mubr.f32.gmra.mrb[0].mxu0 %v419
    %v512 = vpop.f32.mrb[0].mxu0
    %v513 = vadd.f32 %v384, %v512
    %v514 = vpop.f32.mrb[0].mxu0
    %515 = vmatprep.mubr.f32.mxu0 0.0
    %516 = vmatmul.mubr.f32.gmra.mrb[0].mxu0 %v422
    %v517 = vpop.f32.mrb[0].mxu0
    %v518 = vadd.f32 %v389, %v517
    %v519 = vpop.f32.mrb[0].mxu0
    %520 = vmatprep.mubr.f32.mxu0 0.0
    %521 = vmatmul.mubr.f32.gmra.mrb[0].mxu0 %v425
    %v522 = vpop.f32.mrb[0].mxu0
    %v523 = vadd.f32 %v394, %v522
    %v524 = vpop.f32.mrb[0].mxu0
    %525 = vmatprep.mubr.f32.mxu0 0.0
    %526 = vmatmul.mubr.f32.gmra.mrb[0].mxu0 %v428
    %v527 = vpop.f32.mrb[0].mxu0
    %v528 = vadd.f32 %v399, %v527
    %v529 = vpop.f32.mrb[0].mxu0
    %530 = vmatprep.mubr.f32.mxu0 0.0
    %531 = vmatmul.mubr.f32.gmra.mrb[0].mxu0 %v431
    %v532 = vpop.f32.mrb[0].mxu0
    %v533 = vadd.f32 %v404, %v532
    %v534 = vpop.f32.mrb[0].mxu0
    %535 = vmatprep.mubr.f32.mxu0 0.0
    %536 = vmatmul.mubr.f32.gmra.mrb[0].mxu0 %v434
    %v537 = vpop.f32.mrb[0].mxu0
    %v538 = vadd.f32 %v409, %v537
    %v539 = vpop.f32.mrb[0].mxu0
    %540 = vdwg.mxu0
    %v541 = vadd.f32 %v503, %v188
    %v542 = vadd.f32 %v508, %v188
    %v543 = vadd.f32 %v513, %v188
    %v544 = vadd.f32 %v518, %v188
    %v545 = vadd.f32 %v523, %v188
    %v546 = vadd.f32 %v528, %v188
    %v547 = vadd.f32 %v533, %v188
    %v548 = vadd.f32 %v538, %v188
    %vm549 = vcmp.ge.f32.partialorder %v541, 0.0
    %vm550 = vcmp.ge.f32.partialorder %v542, 0.0
    %vm551 = vcmp.ge.f32.partialorder %v543, 0.0
    %vm552 = vcmp.ge.f32.partialorder %v544, 0.0
    %vm553 = vcmp.ge.f32.partialorder %v545, 0.0
    %vm554 = vcmp.ge.f32.partialorder %v546, 0.0
    %vm555 = vcmp.ge.f32.partialorder %v547, 0.0
    %vm556 = vcmp.ge.f32.partialorder %v548, 0.0
    %v557 = vmul.f32 %v541, 0.2
    %v558 = vmul.f32 %v542, 0.2
    %v559 = vmul.f32 %v543, 0.2
    %v560 = vmul.f32 %v544, 0.2
    %v561 = vmul.f32 %v545, 0.2
    %v562 = vmul.f32 %v546, 0.2
    %v563 = vmul.f32 %v547, 0.2
    %v564 = vmul.f32 %v548, 0.2
    %v565 = vsel %vm549, %v541, %v557
    %v566 = vsel %vm550, %v542, %v558
    %v567 = vsel %vm551, %v543, %v559
    %v568 = vsel %vm552, %v544, %v560
    %v569 = vsel %vm553, %v545, %v561
    %v570 = vsel %vm554, %v546, %v562
    %v571 = vsel %vm555, %v547, %v563
    %v572 = vsel %vm556, %v548, %v564
    %v573 = vld [vmem:[%s2] sm:$0xff]
    %v574 = vld [vmem:[%s2 + $0x8] sm:$0xff]
    %v575 = vld [vmem:[%s2 + $0x10] sm:$0xff]
    %v576 = vld [vmem:[%s2 + $0x18] sm:$0xff]
    %v577 = vld [vmem:[%s2 + $0x20] sm:$0xff]
    %v578 = vld [vmem:[%s2 + $0x28] sm:$0xff]
    %v579 = vld [vmem:[%s2 + $0x30] sm:$0xff]
    %v580 = vld [vmem:[%s2 + $0x38] sm:$0xff]
    %v581 = vadd.f32 %v565, %v573
    %v582 = vadd.f32 %v566, %v574
    %v583 = vadd.f32 %v567, %v575
    %v584 = vadd.f32 %v568, %v576
    %v585 = vadd.f32 %v569, %v577
    %v586 = vadd.f32 %v570, %v578
    %v587 = vadd.f32 %v571, %v579
    %v588 = vadd.f32 %v572, %v580
    %v589 = vld [vmem:[%s8] sm:$0x3]
    %v590 = vld [vmem:[%s9] sm:$0x3]
    %v591 = vlaneseq
    %v592 = vshrl.u32 %v591, 7
    %v593 = vsub.s32 0, %v592
    %v594 = vrot.slane %v589, %v593
    %v595 = vmul.f32 %v581, %v594
    %v596 = vmul.f32 %v582, %v594
    %v597 = vmul.f32 %v583, %v594
    %v598 = vmul.f32 %v584, %v594
    %v599 = vmul.f32 %v585, %v594
    %v600 = vmul.f32 %v586, %v594
    %v601 = vmul.f32 %v587, %v594
    %v602 = vmul.f32 %v588, %v594
    %vm603 = vcmask 15360
    %v604 = vsel %vm603, %v595, 0.0
    %605 = vadd.xlane.f32.xlu0 %v604
    %v606 = vpop.xlane.xlu0 %605
    %v607 = vsel %vm603, %v596, 0.0
    %608 = vadd.xlane.f32.xlu0 %v607
    %v609 = vpop.xlane.xlu0 %608
    %v610 = vsel %vm603, %v597, 0.0
    %611 = vadd.xlane.f32.xlu0 %v610
    %v612 = vpop.xlane.xlu0 %611
    %v613 = vsel %vm603, %v598, 0.0
    %614 = vadd.xlane.f32.xlu0 %v613
    %v615 = vpop.xlane.xlu0 %614
    %v616 = vsel %vm603, %v599, 0.0
    %617 = vadd.xlane.f32.xlu0 %v616
    %v618 = vpop.xlane.xlu0 %617
    %v619 = vsel %vm603, %v600, 0.0
    %620 = vadd.xlane.f32.xlu0 %v619
    %v621 = vpop.xlane.xlu0 %620
    %v622 = vsel %vm603, %v601, 0.0
    %623 = vadd.xlane.f32.xlu0 %v622
    %v624 = vpop.xlane.xlu0 %623
    %v625 = vsel %vm603, %v602, 0.0
    %626 = vadd.xlane.f32.xlu0 %v625
    %v627 = vpop.xlane.xlu0 %626
    %v636 = vlaneseq
    %v637 = vand.u32 %v636, 127
    %v638 = vlaneseq
    %v639 = vshrl.u32 %v638, 7
    %v640 = vsub.s32 %v637, %v639
    %v641 = vrot.slane %v606, %v640
    %v642 = vlaneseq
    %v643 = vshrl.u32 %v642, 7
    %v644 = vsub.s32 %v637, %v643
    %v645 = vrot.slane %v609, %v644
    %v646 = vlaneseq
    %v647 = vshrl.u32 %v646, 7
    %v648 = vsub.s32 %v637, %v647
    %v649 = vrot.slane %v612, %v648
    %v650 = vlaneseq
    %v651 = vshrl.u32 %v650, 7
    %v652 = vsub.s32 %v637, %v651
    %v653 = vrot.slane %v615, %v652
    %v654 = vlaneseq
    %v655 = vshrl.u32 %v654, 7
    %v656 = vsub.s32 %v637, %v655
    %v657 = vrot.slane %v618, %v656
    %v658 = vlaneseq
    %v659 = vshrl.u32 %v658, 7
    %v660 = vsub.s32 %v637, %v659
    %v661 = vrot.slane %v621, %v660
    %v662 = vlaneseq
    %v663 = vshrl.u32 %v662, 7
    %v664 = vsub.s32 %v637, %v663
    %v665 = vrot.slane %v624, %v664
    %v666 = vlaneseq
    %v667 = vshrl.u32 %v666, 7
    %v668 = vsub.s32 %v637, %v667
    %v669 = vrot.slane %v627, %v668
    %vm670 = vcmask 1041409
    %v671 = vsel %vm670, %v645, %v641
    %vm672 = vcmask 1042434
    %v673 = vsel %vm672, %v649, %v671
    %vm674 = vcmask 1043459
    %v675 = vsel %vm674, %v653, %v673
    %vm676 = vcmask 1044484
    %v677 = vsel %vm676, %v657, %v675
    %vm678 = vcmask 1045509
    %v679 = vsel %vm678, %v661, %v677
    %vm680 = vcmask 1046534
    %v681 = vsel %vm680, %v665, %v679
    %vm682 = vcmask 1047559
    %v683 = vsel %vm682, %v669, %v681
    %v685 = vsel %vm282, %v683, -inf
    %686 = vmax.xlane.f32.xlu0 %v685
    %v687 = vpop.xlane.xlu0 %686
    %v689 = vlaneseq
    %v690 = vshrl.u32 %v689, 7
    %v691 = vsub.s32 0, %v690
    %v692 = vrot.slane %v687, %v691
    %v693 = vlaneseq
    %v694 = vshrl.u32 %v693, 7
    %v695 = vsub.s32 1, %v694
    %v696 = vrot.slane %v687, %v695
    %v697 = vlaneseq
    %v698 = vshrl.u32 %v697, 7
    %v699 = vsub.s32 2, %v698
    %v700 = vrot.slane %v687, %v699
    %v701 = vlaneseq
    %v702 = vshrl.u32 %v701, 7
    %v703 = vsub.s32 3, %v702
    %v704 = vrot.slane %v687, %v703
    %v705 = vlaneseq
    %v706 = vshrl.u32 %v705, 7
    %v707 = vsub.s32 4, %v706
    %v708 = vrot.slane %v687, %v707
    %v709 = vlaneseq
    %v710 = vshrl.u32 %v709, 7
    %v711 = vsub.s32 5, %v710
    %v712 = vrot.slane %v687, %v711
    %v713 = vlaneseq
    %v714 = vshrl.u32 %v713, 7
    %v715 = vsub.s32 6, %v714
    %v716 = vrot.slane %v687, %v715
    %v717 = vlaneseq
    %v718 = vshrl.u32 %v717, 7
    %v719 = vsub.s32 7, %v718
    %v720 = vrot.slane %v687, %v719
    %v729 = vsub.f32 %v606, %v692
    %v730 = vsub.f32 %v609, %v696
    %v731 = vsub.f32 %v612, %v700
    %v732 = vsub.f32 %v615, %v704
    %v733 = vsub.f32 %v618, %v708
    %v734 = vsub.f32 %v621, %v712
    %v735 = vsub.f32 %v624, %v716
    %v736 = vsub.f32 %v627, %v720
    %v737 = vmul.f32 %v729, 1.442695
    %v738 = vpow.pop %v737
    %v739 = vmul.f32 %v730, 1.442695
    %v740 = vpow.pop %v739
    %v741 = vmul.f32 %v731, 1.442695
    %v742 = vpow.pop %v741
    %v743 = vmul.f32 %v732, 1.442695
    %v744 = vpow.pop %v743
    %v745 = vmul.f32 %v733, 1.442695
    %v746 = vpow.pop %v745
    %v747 = vmul.f32 %v734, 1.442695
    %v748 = vpow.pop %v747
    %v749 = vmul.f32 %v735, 1.442695
    %v750 = vpow.pop %v749
    %v751 = vmul.f32 %v736, 1.442695
    %v752 = vpow.pop %v751
    %761 = vset.pattern.permute.xlu0 0
    %762 = vperm.xlu0 %761, %v738
    %v763 = vpop.permute.xlu0 %762
    %764 = vset.pattern.permute.xlu0 0
    %765 = vperm.xlu0 %764, %v740
    %v766 = vpop.permute.xlu0 %765
    %767 = vset.pattern.permute.xlu0 0
    %768 = vperm.xlu0 %767, %v742
    %v769 = vpop.permute.xlu0 %768
    %770 = vset.pattern.permute.xlu0 0
    %771 = vperm.xlu0 %770, %v744
    %v772 = vpop.permute.xlu0 %771
    %773 = vset.pattern.permute.xlu0 0
    %774 = vperm.xlu0 %773, %v746
    %v775 = vpop.permute.xlu0 %774
    %776 = vset.pattern.permute.xlu0 0
    %777 = vperm.xlu0 %776, %v748
    %v778 = vpop.permute.xlu0 %777
    %779 = vset.pattern.permute.xlu0 0
    %780 = vperm.xlu0 %779, %v750
    %v781 = vpop.permute.xlu0 %780
    %782 = vset.pattern.permute.xlu0 0
    %783 = vperm.xlu0 %782, %v752
    %v784 = vpop.permute.xlu0 %783
    %v785 = vlaneseq
    %v786 = vshrl.u32 %v785, 7
    %v787 = vsub.s32 %v637, %v786
    %v788 = vrot.slane %v763, %v787
    %v789 = vlaneseq
    %v790 = vshrl.u32 %v789, 7
    %v791 = vsub.s32 %v637, %v790
    %v792 = vrot.slane %v766, %v791
    %v793 = vlaneseq
    %v794 = vshrl.u32 %v793, 7
    %v795 = vsub.s32 %v637, %v794
    %v796 = vrot.slane %v769, %v795
    %v797 = vlaneseq
    %v798 = vshrl.u32 %v797, 7
    %v799 = vsub.s32 %v637, %v798
    %v800 = vrot.slane %v772, %v799
    %v801 = vlaneseq
    %v802 = vshrl.u32 %v801, 7
    %v803 = vsub.s32 %v637, %v802
    %v804 = vrot.slane %v775, %v803
    %v805 = vlaneseq
    %v806 = vshrl.u32 %v805, 7
    %v807 = vsub.s32 %v637, %v806
    %v808 = vrot.slane %v778, %v807
    %v809 = vlaneseq
    %v810 = vshrl.u32 %v809, 7
    %v811 = vsub.s32 %v637, %v810
    %v812 = vrot.slane %v781, %v811
    %v813 = vlaneseq
    %v814 = vshrl.u32 %v813, 7
    %v815 = vsub.s32 %v637, %v814
    %v816 = vrot.slane %v784, %v815
    %v817 = vsel %vm670, %v792, %v788
    %v818 = vsel %vm672, %v796, %v817
    %v819 = vsel %vm674, %v800, %v818
    %v820 = vsel %vm676, %v804, %v819
    %v821 = vsel %vm678, %v808, %v820
    %v822 = vsel %vm680, %v812, %v821
    %v823 = vsel %vm682, %v816, %v822
    %v825 = vsel %vm282, %v823, 0.0
    %826 = vadd.xlane.f32.xlu0 %v825
    %v827 = vpop.xlane.xlu0 %826
    %v828 = vmax.f32 %v827, 1e-09
    %v829 = vrcp.pop %v828
    %v831 = vlaneseq
    %v832 = vshrl.u32 %v831, 7
    %v833 = vsub.s32 0, %v832
    %v834 = vrot.slane %v829, %v833
    %v835 = vlaneseq
    %v836 = vshrl.u32 %v835, 7
    %v837 = vsub.s32 1, %v836
    %v838 = vrot.slane %v829, %v837
    %v839 = vlaneseq
    %v840 = vshrl.u32 %v839, 7
    %v841 = vsub.s32 2, %v840
    %v842 = vrot.slane %v829, %v841
    %v843 = vlaneseq
    %v844 = vshrl.u32 %v843, 7
    %v845 = vsub.s32 3, %v844
    %v846 = vrot.slane %v829, %v845
    %v847 = vlaneseq
    %v848 = vshrl.u32 %v847, 7
    %v849 = vsub.s32 4, %v848
    %v850 = vrot.slane %v829, %v849
    %v851 = vlaneseq
    %v852 = vshrl.u32 %v851, 7
    %v853 = vsub.s32 5, %v852
    %v854 = vrot.slane %v829, %v853
    %v855 = vlaneseq
    %v856 = vshrl.u32 %v855, 7
    %v857 = vsub.s32 6, %v856
    %v858 = vrot.slane %v829, %v857
    %v859 = vlaneseq
    %v860 = vshrl.u32 %v859, 7
    %v861 = vsub.s32 7, %v860
    %v862 = vrot.slane %v829, %v861
    %v871 = vmul.f32 %v738, %v834
    %v872 = vmul.f32 %v740, %v838
    %v873 = vmul.f32 %v742, %v842
    %v874 = vmul.f32 %v744, %v846
    %v875 = vmul.f32 %v746, %v850
    %v876 = vmul.f32 %v748, %v854
    %v877 = vmul.f32 %v750, %v858
    %v878 = vmul.f32 %v752, %v862
    %v879 = vlaneseq
    %v880 = vshrl.u32 %v879, 7
    %v881 = vsub.s32 0, %v880
    %v882 = vrot.slane %v590, %v881
    %v883 = vmul.f32 %v110, %v882
    %v884 = vlaneseq
    %v885 = vshrl.u32 %v884, 7
    %v886 = vsub.s32 1, %v885
    %v887 = vrot.slane %v589, %v886
    %v888 = vmul.f32 %v581, %v887
    %v889 = vmul.f32 %v582, %v887
    %v890 = vmul.f32 %v583, %v887
    %v891 = vmul.f32 %v584, %v887
    %v892 = vmul.f32 %v585, %v887
    %v893 = vmul.f32 %v586, %v887
    %v894 = vmul.f32 %v587, %v887
    %v895 = vmul.f32 %v588, %v887
    %v896 = vsel %vm603, %v888, 0.0
    %897 = vadd.xlane.f32.xlu0 %v896
    %v898 = vpop.xlane.xlu0 %897
    %v899 = vsel %vm603, %v889, 0.0
    %900 = vadd.xlane.f32.xlu0 %v899
    %v901 = vpop.xlane.xlu0 %900
    %v902 = vsel %vm603, %v890, 0.0
    %903 = vadd.xlane.f32.xlu0 %v902
    %v904 = vpop.xlane.xlu0 %903
    %v905 = vsel %vm603, %v891, 0.0
    %906 = vadd.xlane.f32.xlu0 %v905
    %v907 = vpop.xlane.xlu0 %906
    %v908 = vsel %vm603, %v892, 0.0
    %909 = vadd.xlane.f32.xlu0 %v908
    %v910 = vpop.xlane.xlu0 %909
    %v911 = vsel %vm603, %v893, 0.0
    %912 = vadd.xlane.f32.xlu0 %v911
    %v913 = vpop.xlane.xlu0 %912
    %v914 = vsel %vm603, %v894, 0.0
    %915 = vadd.xlane.f32.xlu0 %v914
    %v916 = vpop.xlane.xlu0 %915
    %v917 = vsel %vm603, %v895, 0.0
    %918 = vadd.xlane.f32.xlu0 %v917
    %v919 = vpop.xlane.xlu0 %918
    %v928 = vlaneseq
    %v929 = vshrl.u32 %v928, 7
    %v930 = vsub.s32 %v637, %v929
    %v931 = vrot.slane %v898, %v930
    %v932 = vlaneseq
    %v933 = vshrl.u32 %v932, 7
    %v934 = vsub.s32 %v637, %v933
    %v935 = vrot.slane %v901, %v934
    %v936 = vlaneseq
    %v937 = vshrl.u32 %v936, 7
    %v938 = vsub.s32 %v637, %v937
    %v939 = vrot.slane %v904, %v938
    %v940 = vlaneseq
    %v941 = vshrl.u32 %v940, 7
    %v942 = vsub.s32 %v637, %v941
    %v943 = vrot.slane %v907, %v942
    %v944 = vlaneseq
    %v945 = vshrl.u32 %v944, 7
    %v946 = vsub.s32 %v637, %v945
    %v947 = vrot.slane %v910, %v946
    %v948 = vlaneseq
    %v949 = vshrl.u32 %v948, 7
    %v950 = vsub.s32 %v637, %v949
    %v951 = vrot.slane %v913, %v950
    %v952 = vlaneseq
    %v953 = vshrl.u32 %v952, 7
    %v954 = vsub.s32 %v637, %v953
    %v955 = vrot.slane %v916, %v954
    %v956 = vlaneseq
    %v957 = vshrl.u32 %v956, 7
    %v958 = vsub.s32 %v637, %v957
    %v959 = vrot.slane %v919, %v958
    %v960 = vsel %vm670, %v935, %v931
    %v961 = vsel %vm672, %v939, %v960
    %v962 = vsel %vm674, %v943, %v961
    %v963 = vsel %vm676, %v947, %v962
    %v964 = vsel %vm678, %v951, %v963
    %v965 = vsel %vm680, %v955, %v964
    %v966 = vsel %vm682, %v959, %v965
    %v968 = vsel %vm282, %v966, -inf
    %969 = vmax.xlane.f32.xlu0 %v968
    %v970 = vpop.xlane.xlu0 %969
    %v972 = vlaneseq
    %v973 = vshrl.u32 %v972, 7
    %v974 = vsub.s32 0, %v973
    %v975 = vrot.slane %v970, %v974
    %v976 = vlaneseq
    %v977 = vshrl.u32 %v976, 7
    %v978 = vsub.s32 1, %v977
    %v979 = vrot.slane %v970, %v978
    %v980 = vlaneseq
    %v981 = vshrl.u32 %v980, 7
    %v982 = vsub.s32 2, %v981
    %v983 = vrot.slane %v970, %v982
    %v984 = vlaneseq
    %v985 = vshrl.u32 %v984, 7
    %v986 = vsub.s32 3, %v985
    %v987 = vrot.slane %v970, %v986
    %v988 = vlaneseq
    %v989 = vshrl.u32 %v988, 7
    %v990 = vsub.s32 4, %v989
    %v991 = vrot.slane %v970, %v990
    %v992 = vlaneseq
    %v993 = vshrl.u32 %v992, 7
    %v994 = vsub.s32 5, %v993
    %v995 = vrot.slane %v970, %v994
    %v996 = vlaneseq
    %v997 = vshrl.u32 %v996, 7
    %v998 = vsub.s32 6, %v997
    %v999 = vrot.slane %v970, %v998
    %v1000 = vlaneseq
    %v1001 = vshrl.u32 %v1000, 7
    %v1002 = vsub.s32 7, %v1001
    %v1003 = vrot.slane %v970, %v1002
    %v1012 = vsub.f32 %v898, %v975
    %v1013 = vsub.f32 %v901, %v979
    %v1014 = vsub.f32 %v904, %v983
    %v1015 = vsub.f32 %v907, %v987
    %v1016 = vsub.f32 %v910, %v991
    %v1017 = vsub.f32 %v913, %v995
    %v1018 = vsub.f32 %v916, %v999
    %v1019 = vsub.f32 %v919, %v1003
    %v1020 = vmul.f32 %v1012, 1.442695
    %v1021 = vpow.pop %v1020
    %v1022 = vmul.f32 %v1013, 1.442695
    %v1023 = vpow.pop %v1022
    %v1024 = vmul.f32 %v1014, 1.442695
    %v1025 = vpow.pop %v1024
    %v1026 = vmul.f32 %v1015, 1.442695
    %v1027 = vpow.pop %v1026
    %v1028 = vmul.f32 %v1016, 1.442695
    %v1029 = vpow.pop %v1028
    %v1030 = vmul.f32 %v1017, 1.442695
    %v1031 = vpow.pop %v1030
    %v1032 = vmul.f32 %v1018, 1.442695
    %v1033 = vpow.pop %v1032
    %v1034 = vmul.f32 %v1019, 1.442695
    %v1035 = vpow.pop %v1034
    %1044 = vset.pattern.permute.xlu0 0
    %1045 = vperm.xlu0 %1044, %v1021
    %v1046 = vpop.permute.xlu0 %1045
    %1047 = vset.pattern.permute.xlu0 0
    %1048 = vperm.xlu0 %1047, %v1023
    %v1049 = vpop.permute.xlu0 %1048
    %1050 = vset.pattern.permute.xlu0 0
    %1051 = vperm.xlu0 %1050, %v1025
    %v1052 = vpop.permute.xlu0 %1051
    %1053 = vset.pattern.permute.xlu0 0
    %1054 = vperm.xlu0 %1053, %v1027
    %v1055 = vpop.permute.xlu0 %1054
    %1056 = vset.pattern.permute.xlu0 0
    %1057 = vperm.xlu0 %1056, %v1029
    %v1058 = vpop.permute.xlu0 %1057
    %1059 = vset.pattern.permute.xlu0 0
    %1060 = vperm.xlu0 %1059, %v1031
    %v1061 = vpop.permute.xlu0 %1060
    %1062 = vset.pattern.permute.xlu0 0
    %1063 = vperm.xlu0 %1062, %v1033
    %v1064 = vpop.permute.xlu0 %1063
    %1065 = vset.pattern.permute.xlu0 0
    %1066 = vperm.xlu0 %1065, %v1035
    %v1067 = vpop.permute.xlu0 %1066
    %v1068 = vlaneseq
    %v1069 = vshrl.u32 %v1068, 7
    %v1070 = vsub.s32 %v637, %v1069
    %v1071 = vrot.slane %v1046, %v1070
    %v1072 = vlaneseq
    %v1073 = vshrl.u32 %v1072, 7
    %v1074 = vsub.s32 %v637, %v1073
    %v1075 = vrot.slane %v1049, %v1074
    %v1076 = vlaneseq
    %v1077 = vshrl.u32 %v1076, 7
    %v1078 = vsub.s32 %v637, %v1077
    %v1079 = vrot.slane %v1052, %v1078
    %v1080 = vlaneseq
    %v1081 = vshrl.u32 %v1080, 7
    %v1082 = vsub.s32 %v637, %v1081
    %v1083 = vrot.slane %v1055, %v1082
    %v1084 = vlaneseq
    %v1085 = vshrl.u32 %v1084, 7
    %v1086 = vsub.s32 %v637, %v1085
    %v1087 = vrot.slane %v1058, %v1086
    %v1088 = vlaneseq
    %v1089 = vshrl.u32 %v1088, 7
    %v1090 = vsub.s32 %v637, %v1089
    %v1091 = vrot.slane %v1061, %v1090
    %v1092 = vlaneseq
    %v1093 = vshrl.u32 %v1092, 7
    %v1094 = vsub.s32 %v637, %v1093
    %v1095 = vrot.slane %v1064, %v1094
    %v1096 = vlaneseq
    %v1097 = vshrl.u32 %v1096, 7
    %v1098 = vsub.s32 %v637, %v1097
    %v1099 = vrot.slane %v1067, %v1098
    %v1100 = vsel %vm670, %v1075, %v1071
    %v1101 = vsel %vm672, %v1079, %v1100
    %v1102 = vsel %vm674, %v1083, %v1101
    %v1103 = vsel %vm676, %v1087, %v1102
    %v1104 = vsel %vm678, %v1091, %v1103
    %v1105 = vsel %vm680, %v1095, %v1104
    %v1106 = vsel %vm682, %v1099, %v1105
    %v1108 = vsel %vm282, %v1106, 0.0
    %1109 = vadd.xlane.f32.xlu0 %v1108
    %v1110 = vpop.xlane.xlu0 %1109
    %v1111 = vmax.f32 %v1110, 1e-09
    %v1112 = vrcp.pop %v1111
    %v1114 = vlaneseq
    %v1115 = vshrl.u32 %v1114, 7
    %v1116 = vsub.s32 0, %v1115
    %v1117 = vrot.slane %v1112, %v1116
    %v1118 = vlaneseq
    %v1119 = vshrl.u32 %v1118, 7
    %v1120 = vsub.s32 1, %v1119
    %v1121 = vrot.slane %v1112, %v1120
    %v1122 = vlaneseq
    %v1123 = vshrl.u32 %v1122, 7
    %v1124 = vsub.s32 2, %v1123
    %v1125 = vrot.slane %v1112, %v1124
    %v1126 = vlaneseq
    %v1127 = vshrl.u32 %v1126, 7
    %v1128 = vsub.s32 3, %v1127
    %v1129 = vrot.slane %v1112, %v1128
    %v1130 = vlaneseq
    %v1131 = vshrl.u32 %v1130, 7
    %v1132 = vsub.s32 4, %v1131
    %v1133 = vrot.slane %v1112, %v1132
    %v1134 = vlaneseq
    %v1135 = vshrl.u32 %v1134, 7
    %v1136 = vsub.s32 5, %v1135
    %v1137 = vrot.slane %v1112, %v1136
    %v1138 = vlaneseq
    %v1139 = vshrl.u32 %v1138, 7
    %v1140 = vsub.s32 6, %v1139
    %v1141 = vrot.slane %v1112, %v1140
    %v1142 = vlaneseq
    %v1143 = vshrl.u32 %v1142, 7
    %v1144 = vsub.s32 7, %v1143
    %v1145 = vrot.slane %v1112, %v1144
    %v1154 = vmul.f32 %v1021, %v1117
    %v1155 = vmul.f32 %v1023, %v1121
    %v1156 = vmul.f32 %v1025, %v1125
    %v1157 = vmul.f32 %v1027, %v1129
    %v1158 = vmul.f32 %v1029, %v1133
    %v1159 = vmul.f32 %v1031, %v1137
    %v1160 = vmul.f32 %v1033, %v1141
    %v1161 = vmul.f32 %v1035, %v1145
    %v1162 = vlaneseq
    %v1163 = vshrl.u32 %v1162, 7
    %v1164 = vsub.s32 1, %v1163
    %v1165 = vrot.slane %v590, %v1164
    %v1166 = vmul.f32 %v110, %v1165
    %1175 = vset.pattern.permute.xlu0 0
    %1176 = vperm.xlu0 %1175, %v1154
    %v1177 = vpop.permute.xlu0 %1176
    %1178 = vset.pattern.permute.xlu0 0
    %1179 = vperm.xlu0 %1178, %v1155
    %v1180 = vpop.permute.xlu0 %1179
    %1181 = vset.pattern.permute.xlu0 0
    %1182 = vperm.xlu0 %1181, %v1156
    %v1183 = vpop.permute.xlu0 %1182
    %1184 = vset.pattern.permute.xlu0 0
    %1185 = vperm.xlu0 %1184, %v1157
    %v1186 = vpop.permute.xlu0 %1185
    %1187 = vset.pattern.permute.xlu0 0
    %1188 = vperm.xlu0 %1187, %v1158
    %v1189 = vpop.permute.xlu0 %1188
    %1190 = vset.pattern.permute.xlu0 0
    %1191 = vperm.xlu0 %1190, %v1159
    %v1192 = vpop.permute.xlu0 %1191
    %1193 = vset.pattern.permute.xlu0 0
    %1194 = vperm.xlu0 %1193, %v1160
    %v1195 = vpop.permute.xlu0 %1194
    %1196 = vset.pattern.permute.xlu0 0
    %1197 = vperm.xlu0 %1196, %v1161
    %v1198 = vpop.permute.xlu0 %1197
    %v1199 = vlaneseq
    %v1200 = vshrl.u32 %v1199, 7
    %v1201 = vsub.s32 %v637, %v1200
    %v1202 = vrot.slane %v1177, %v1201
    %v1203 = vlaneseq
    %v1204 = vshrl.u32 %v1203, 7
    %v1205 = vsub.s32 %v637, %v1204
    %v1206 = vrot.slane %v1180, %v1205
    %v1207 = vlaneseq
    %v1208 = vshrl.u32 %v1207, 7
    %v1209 = vsub.s32 %v637, %v1208
    %v1210 = vrot.slane %v1183, %v1209
    %v1211 = vlaneseq
    %v1212 = vshrl.u32 %v1211, 7
    %v1213 = vsub.s32 %v637, %v1212
    %v1214 = vrot.slane %v1186, %v1213
    %v1215 = vlaneseq
    %v1216 = vshrl.u32 %v1215, 7
    %v1217 = vsub.s32 %v637, %v1216
    %v1218 = vrot.slane %v1189, %v1217
    %v1219 = vlaneseq
    %v1220 = vshrl.u32 %v1219, 7
    %v1221 = vsub.s32 %v637, %v1220
    %v1222 = vrot.slane %v1192, %v1221
    %v1223 = vlaneseq
    %v1224 = vshrl.u32 %v1223, 7
    %v1225 = vsub.s32 %v637, %v1224
    %v1226 = vrot.slane %v1195, %v1225
    %v1227 = vlaneseq
    %v1228 = vshrl.u32 %v1227, 7
    %v1229 = vsub.s32 %v637, %v1228
    %v1230 = vrot.slane %v1198, %v1229
    %v1231 = vsel %vm670, %v1206, %v1202
    %v1232 = vsel %vm672, %v1210, %v1231
    %v1233 = vsel %vm674, %v1214, %v1232
    %v1234 = vsel %vm676, %v1218, %v1233
    %v1235 = vsel %vm678, %v1222, %v1234
    %v1236 = vsel %vm680, %v1226, %v1235
    %v1237 = vsel %vm682, %v1230, %v1236
    %v1238 = vsel %vm282, %v1237, 0
    %1240 = vmatprep.subr.mxu0 0.0
    %1241 = vmatpush1.msra.mxu0 %v1166
    %1242 = vmatprep.subr.mxu0 0.0
    %1243 = vmatpush1.msra.mxu0 0.0
    %1244 = vmatprep.subr.mxu0 0.0
    %1245 = vmatpush1.msra.mxu0 0.0
    %1246 = vmatprep.subr.mxu0 0.0
    %1247 = vmatpush1.msra.mxu0 0.0
    %1248 = vmatprep.subr.mxu0 0.0
    %1249 = vmatpush1.msra.mxu0 0.0
    %1250 = vmatprep.subr.mxu0 0.0
    %1251 = vmatpush1.msra.mxu0 0.0
    %1252 = vmatprep.subr.mxu0 0.0
    %1253 = vmatpush1.msra.mxu0 0.0
    %1254 = vmatprep.subr.mxu0 0.0
    %1255 = vmatpush1.msra.mxu0 0.0
    %1256 = vmatprep.subr.mxu0 0.0
    %1257 = vmatpush1.msra.mxu0 0.0
    %1258 = vmatprep.subr.mxu0 0.0
    %1259 = vmatpush1.msra.mxu0 0.0
    %1260 = vmatprep.subr.mxu0 0.0
    %1261 = vmatpush1.msra.mxu0 0.0
    %1262 = vmatprep.subr.mxu0 0.0
    %1263 = vmatpush1.msra.mxu0 0.0
    %1264 = vmatprep.subr.mxu0 0.0
    %1265 = vmatpush1.msra.mxu0 0.0
    %1266 = vmatprep.subr.mxu0 0.0
    %1267 = vmatpush1.msra.mxu0 0.0
    %1268 = vmatprep.subr.mxu0 0.0
    %1269 = vmatpush1.msra.mxu0 0.0
    %1270 = vmatprep.subr.mxu0 0.0
    %1271 = vmatpush1.msra.mxu0 0.0
    %1272 = vmatprep.subr.mxu0 0.0
    %1273 = vmatpush1.msra.mxu0 0.0
    %1274 = vmatprep.subr.mxu0 0.0
    %1275 = vmatpush1.msra.mxu0 0.0
    %1276 = vmatprep.subr.mxu0 0.0
    %1277 = vmatpush1.msra.mxu0 0.0
    %1278 = vmatprep.subr.mxu0 0.0
    %1279 = vmatpush1.msra.mxu0 0.0
    %1280 = vmatprep.subr.mxu0 0.0
    %1281 = vmatpush1.msra.mxu0 0.0
    %1282 = vmatprep.subr.mxu0 0.0
    %1283 = vmatpush1.msra.mxu0 0.0
    %1284 = vmatprep.subr.mxu0 0.0
    %1285 = vmatpush1.msra.mxu0 0.0
    %1286 = vmatprep.subr.mxu0 0.0
    %1287 = vmatpush1.msra.mxu0 0.0
    %1288 = vmatprep.subr.mxu0 0.0
    %1289 = vmatpush1.msra.mxu0 0.0
    %1290 = vmatprep.subr.mxu0 0.0
    %1291 = vmatpush1.msra.mxu0 0.0
    %1292 = vmatprep.subr.mxu0 0.0
    %1293 = vmatpush1.msra.mxu0 0.0
    %1294 = vmatprep.subr.mxu0 0.0
    %1295 = vmatpush1.msra.mxu0 0.0
    %1296 = vmatprep.subr.mxu0 0.0
    %1297 = vmatpush1.msra.mxu0 0.0
    %1298 = vmatprep.subr.mxu0 0.0
    %1299 = vmatpush1.msra.mxu0 0.0
    %1300 = vmatprep.subr.mxu0 0.0
    %1301 = vmatpush1.msra.mxu0 0.0
    %1302 = vmatprep.subr.mxu0 0.0
    %1303 = vmatpush1.msra.mxu0 0.0
    %1304 = vmatprep.mubr.f32.mxu0 0.0
    %1305 = vmatmul.mubr.f32.gmra.mrb[0].mxu0 %v1238
    %v1306 = vpop.f32.mrb[0].mxu0
    %v1307 = vadd.f32 0.0, %v1306
    %v1308 = vpop.f32.mrb[0].mxu0
    %1309 = vdwg.mxu0
    %1318 = vset.pattern.permute.xlu0 0
    %1319 = vperm.xlu0 %1318, %v871
    %v1320 = vpop.permute.xlu0 %1319
    %1321 = vset.pattern.permute.xlu0 0
    %1322 = vperm.xlu0 %1321, %v872
    %v1323 = vpop.permute.xlu0 %1322
    %1324 = vset.pattern.permute.xlu0 0
    %1325 = vperm.xlu0 %1324, %v873
    %v1326 = vpop.permute.xlu0 %1325
    %1327 = vset.pattern.permute.xlu0 0
    %1328 = vperm.xlu0 %1327, %v874
    %v1329 = vpop.permute.xlu0 %1328
    %1330 = vset.pattern.permute.xlu0 0
    %1331 = vperm.xlu0 %1330, %v875
    %v1332 = vpop.permute.xlu0 %1331
    %1333 = vset.pattern.permute.xlu0 0
    %1334 = vperm.xlu0 %1333, %v876
    %v1335 = vpop.permute.xlu0 %1334
    %1336 = vset.pattern.permute.xlu0 0
    %1337 = vperm.xlu0 %1336, %v877
    %v1338 = vpop.permute.xlu0 %1337
    %1339 = vset.pattern.permute.xlu0 0
    %1340 = vperm.xlu0 %1339, %v878
    %v1341 = vpop.permute.xlu0 %1340
    %v1342 = vlaneseq
    %v1343 = vshrl.u32 %v1342, 7
    %v1344 = vsub.s32 %v637, %v1343
    %v1345 = vrot.slane %v1320, %v1344
    %v1346 = vlaneseq
    %v1347 = vshrl.u32 %v1346, 7
    %v1348 = vsub.s32 %v637, %v1347
    %v1349 = vrot.slane %v1323, %v1348
    %v1350 = vlaneseq
    %v1351 = vshrl.u32 %v1350, 7
    %v1352 = vsub.s32 %v637, %v1351
    %v1353 = vrot.slane %v1326, %v1352
    %v1354 = vlaneseq
    %v1355 = vshrl.u32 %v1354, 7
    %v1356 = vsub.s32 %v637, %v1355
    %v1357 = vrot.slane %v1329, %v1356
    %v1358 = vlaneseq
    %v1359 = vshrl.u32 %v1358, 7
    %v1360 = vsub.s32 %v637, %v1359
    %v1361 = vrot.slane %v1332, %v1360
    %v1362 = vlaneseq
    %v1363 = vshrl.u32 %v1362, 7
    %v1364 = vsub.s32 %v637, %v1363
    %v1365 = vrot.slane %v1335, %v1364
    %v1366 = vlaneseq
    %v1367 = vshrl.u32 %v1366, 7
    %v1368 = vsub.s32 %v637, %v1367
    %v1369 = vrot.slane %v1338, %v1368
    %v1370 = vlaneseq
    %v1371 = vshrl.u32 %v1370, 7
    %v1372 = vsub.s32 %v637, %v1371
    %v1373 = vrot.slane %v1341, %v1372
    %v1374 = vsel %vm670, %v1349, %v1345
    %v1375 = vsel %vm672, %v1353, %v1374
    %v1376 = vsel %vm674, %v1357, %v1375
    %v1377 = vsel %vm676, %v1361, %v1376
    %v1378 = vsel %vm678, %v1365, %v1377
    %v1379 = vsel %vm680, %v1369, %v1378
    %v1380 = vsel %vm682, %v1373, %v1379
    %v1381 = vsel %vm282, %v1380, 0
    %1383 = vmatprep.subr.mxu0 0.0
    %1384 = vmatpush1.msra.mxu0 %v883
    %1385 = vmatprep.subr.mxu0 0.0
    %1386 = vmatpush1.msra.mxu0 0.0
    %1387 = vmatprep.subr.mxu0 0.0
    %1388 = vmatpush1.msra.mxu0 0.0
    %1389 = vmatprep.subr.mxu0 0.0
    %1390 = vmatpush1.msra.mxu0 0.0
    %1391 = vmatprep.subr.mxu0 0.0
    %1392 = vmatpush1.msra.mxu0 0.0
    %1393 = vmatprep.subr.mxu0 0.0
    %1394 = vmatpush1.msra.mxu0 0.0
    %1395 = vmatprep.subr.mxu0 0.0
    %1396 = vmatpush1.msra.mxu0 0.0
    %1397 = vmatprep.subr.mxu0 0.0
    %1398 = vmatpush1.msra.mxu0 0.0
    %1399 = vmatprep.subr.mxu0 0.0
    %1400 = vmatpush1.msra.mxu0 0.0
    %1401 = vmatprep.subr.mxu0 0.0
    %1402 = vmatpush1.msra.mxu0 0.0
    %1403 = vmatprep.subr.mxu0 0.0
    %1404 = vmatpush1.msra.mxu0 0.0
    %1405 = vmatprep.subr.mxu0 0.0
    %1406 = vmatpush1.msra.mxu0 0.0
    %1407 = vmatprep.subr.mxu0 0.0
    %1408 = vmatpush1.msra.mxu0 0.0
    %1409 = vmatprep.subr.mxu0 0.0
    %1410 = vmatpush1.msra.mxu0 0.0
    %1411 = vmatprep.subr.mxu0 0.0
    %1412 = vmatpush1.msra.mxu0 0.0
    %1413 = vmatprep.subr.mxu0 0.0
    %1414 = vmatpush1.msra.mxu0 0.0
    %1415 = vmatprep.subr.mxu0 0.0
    %1416 = vmatpush1.msra.mxu0 0.0
    %1417 = vmatprep.subr.mxu0 0.0
    %1418 = vmatpush1.msra.mxu0 0.0
    %1419 = vmatprep.subr.mxu0 0.0
    %1420 = vmatpush1.msra.mxu0 0.0
    %1421 = vmatprep.subr.mxu0 0.0
    %1422 = vmatpush1.msra.mxu0 0.0
    %1423 = vmatprep.subr.mxu0 0.0
    %1424 = vmatpush1.msra.mxu0 0.0
    %1425 = vmatprep.subr.mxu0 0.0
    %1426 = vmatpush1.msra.mxu0 0.0
    %1427 = vmatprep.subr.mxu0 0.0
    %1428 = vmatpush1.msra.mxu0 0.0
    %1429 = vmatprep.subr.mxu0 0.0
    %1430 = vmatpush1.msra.mxu0 0.0
    %1431 = vmatprep.subr.mxu0 0.0
    %1432 = vmatpush1.msra.mxu0 0.0
    %1433 = vmatprep.subr.mxu0 0.0
    %1434 = vmatpush1.msra.mxu0 0.0
    %1435 = vmatprep.subr.mxu0 0.0
    %1436 = vmatpush1.msra.mxu0 0.0
    %1437 = vmatprep.subr.mxu0 0.0
    %1438 = vmatpush1.msra.mxu0 0.0
    %1439 = vmatprep.subr.mxu0 0.0
    %1440 = vmatpush1.msra.mxu0 0.0
    %1441 = vmatprep.subr.mxu0 0.0
    %1442 = vmatpush1.msra.mxu0 0.0
    %1443 = vmatprep.subr.mxu0 0.0
    %1444 = vmatpush1.msra.mxu0 0.0
    %1445 = vmatprep.subr.mxu0 0.0
    %1446 = vmatpush1.msra.mxu0 0.0
    %1447 = vmatprep.mubr.f32.mxu0 0.0
    %1448 = vmatmul.mubr.f32.gmra.mrb[0].mxu0 %v1381
    %v1449 = vpop.f32.mrb[0].mxu0
    %v1450 = vadd.f32 %v1307, %v1449
    %v1451 = vpop.f32.mrb[0].mxu0
    %1452 = vdwg.mxu0
    %vm1453 = vcmp.gt.f32.partialorder %v1450, 0.0
    %v1454 = vmul.f32 %v1450, 1.442695
    %v1455 = vpow.pop %v1454
    %v1456 = vsub.f32 %v1455, 1.0
    %v1457 = vsel %vm1453, %v1450, %v1456
    %1458 = vst.msk [vmem:[#allocation2] sm:$0xff] %vm117, %v1457
    // Predicated region
    $region42: #{tpu_custom_call.1} parent=1 // pred_check
      _
    $region43: #{tpu_custom_call.1} parent=1 // pred_check_branch
      %1460 = sbr.rel (0) target = $region45
    $region44: #{tpu_custom_call.1} parent=1 // pred_region
      %s1462 = ssub.s32 128, 128
      %1463 = vsyncadd [#allocation3], %s1462
      %s1465 = sshll.u32 [#allocation2], 4
      %s1466 = int_to_ptr.vmem [resolvable:$true] %s1465
      %1468 = dma.vmem_to_hbm [thread:$0]  %s1466, 128, %s10, [#allocation3]
    $region45: #{tpu_custom_call.1} parent=1 // pred_fallthru
      _
    // Predicated region
    $region46: #{tpu_custom_call.1} parent=1 // pred_check
      _
    $region47: #{tpu_custom_call.1} parent=1 // pred_check_branch
      %1470 = sbr.rel (0) target = $region49
    $region48: #{tpu_custom_call.1} parent=1 // pred_region
      %1471 = dma.done [#allocation3], 128
    $region49: #{tpu_custom_call.1} parent=1 // pred_fallthru
      _
    %1472 = vsyncpa [#allocation3], 1

</llo_original>
